<compile_context>
chip_gen: v7x
topology: tpu7x:2x2x1
jax: 0.10.0
libtpu: 0.0.40
codegen_flags: <defaults>
</compile_context>

<pallas_src>
import functools
from typing import NamedTuple, Tuple

import jax
import jax.numpy as jnp
import numpy as np
from jax.experimental import pallas as pl
from jax.experimental.pallas import tpu as pltpu


class DSCUConfig(NamedTuple):
    n_img: int
    cin: int
    cout: int
    n_br: int
    h: int
    w: int
    wp: int
    hp: int
    pad: int
    span: int                       # h * wp (columns per image)
    l_img: int                      # hp * wp (flattened padded image length)
    k_rows: int                     # fused contraction depth (= n_groups*cin)
    taps: Tuple[Tuple[int, int], ...]   # (xcol_row, flat base offset) per group


# ----------------------------------------------------------------------------
# Fused Pallas kernel: im2col (shared centre tap) + one MXU matmul + bias+ReLU
# ----------------------------------------------------------------------------
def _fused_aspp_kernel(x_ref, w_ref, b_ref, o_ref, xcol_ref, *, cfg):
    # x_ref:    (N, cin, L)        flattened zero-padded images
    # w_ref:    (4*cout, K)        BN-folded, shared-centre block weights
    # b_ref:    (4*cout, 1)        folded BN bias
    # o_ref:    (N, 4*cout, span)  conv+BN+ReLU, padded-width rows
    # xcol_ref: (K, N*span)        VMEM im2col scratch
    cin, span = cfg.cin, cfg.span
    taps = cfg.taps
    n_taps = len(taps)

    # im2col.  All slice starts are static Python ints -> plain static refs.
    # Taps are processed two at a time so each store is a full 8-sublane tile.
    for n in range(cfg.n_img):
        c0 = n * span
        i = 0
        while i + 1 < n_taps:
            r0, b0 = taps[i]
            _, b1 = taps[i + 1]
            top = x_ref[n, :, b0:b0 + span]
            bot = x_ref[n, :, b1:b1 + span]
            xcol_ref[r0:r0 + 2 * cin, c0:c0 + span] = jnp.concatenate(
                [top, bot], axis=0)
            i += 2
        if i < n_taps:                                   # odd leftover group
            r0, b0 = taps[i]
            xcol_ref[r0:r0 + cin, c0:c0 + span] = x_ref[n, :, b0:b0 + span]

    # One fused MXU matmul over a <=128-deep contraction for the whole batch.
    acc = jnp.dot(w_ref[...], xcol_ref[...],
                  preferred_element_type=jnp.float32)

    # Folded-BN bias + ReLU epilogue (single broadcast, lane-dense stores).
    out = jnp.maximum(acc + b_ref[...], 0.0)
    for n in range(cfg.n_img):
        o_ref[n] = out[:, n * span:(n + 1) * span].astype(o_ref.dtype)


# ----------------------------------------------------------------------------
# Host-side (numpy) fused-parameter preparation — done once, outside the trace
# ----------------------------------------------------------------------------
def prepare_dscu(branch_params, dilations, n_img, cin, cout, h, w, eps=1e-5):
    """branch_params[i] = (w_hwio, gamma, beta, running_mean, running_var)."""
    n_br = len(branch_params)
    d_eff, folded = [], []
    bias_list = []
    for (w_hwio, gamma, beta, mean, var), d in zip(branch_params, dilations):
        w_hwio = np.asarray(w_hwio, np.float32)
        gamma = np.asarray(gamma, np.float32)
        beta = np.asarray(beta, np.float32)
        mean = np.asarray(mean, np.float32)
        var = np.asarray(var, np.float32)
        ksz = w_hwio.shape[0]
        is_1x1 = ksz == 1
        d_eff.append(1 if is_1x1 else int(d))
        if is_1x1:
            w3 = np.zeros((3, 3, cin, cout), np.float32)
            w3[1, 1] = w_hwio[0, 0]
        else:
            w3 = w_hwio.copy()
        scale = gamma / np.sqrt(var + eps)               # (cout,)
        w3 = w3 * scale                                  # fold BN scale
        bias_list.append(beta - mean * scale)
        folded.append((w3, is_1x1))

    pad = max(d_eff)
    wp = w + 2 * pad
    extra = -(-2 * pad // wp)        # keeps the widest tap's overread in bounds
    hp = h + 2 * pad + extra
    l_img = hp * wp
    span = h * wp

    # Group layout: group 0 = shared centre tap; then each 3x3 branch's eight
    # non-centre taps in (branch, kh, kw) order.  1x1 branch only uses group 0.
    groups = [pad * wp + pad]                            # flat base offsets
    tap_of = {}                                          # (b, kh, kw) -> group
    for b, ((_, is_1x1), de) in enumerate(zip(folded, d_eff)):
        tap_of[(b, 1, 1)] = 0
        if is_1x1:
            continue
        for kh in range(3):
            for kw in range(3):
                if (kh, kw) == (1, 1):
                    continue
                tap_of[(b, kh, kw)] = len(groups)
                groups.append((pad + (kh - 1) * de) * wp + (pad + (kw - 1) * de))

    k_rows = len(groups) * cin
    c4 = n_br * cout
    w_all = np.zeros((c4, k_rows), np.float32)
    for b, ((w3, is_1x1), _) in enumerate(zip(folded, d_eff)):
        taps = [(1, 1)] if is_1x1 else [(kh, kw)
                                        for kh in range(3) for kw in range(3)]
        for (kh, kw) in taps:
            g = tap_of[(b, kh, kw)]
            w_all[b * cout:(b + 1) * cout, g * cin:(g + 1) * cin] = w3[kh, kw].T
    bias = np.concatenate(bias_list).astype(np.float32).reshape(c4, 1)

    cfg = DSCUConfig(n_img=n_img, cin=cin, cout=cout, n_br=n_br, h=h, w=w,
                     wp=wp, hp=hp, pad=pad, span=span, l_img=l_img,
                     k_rows=k_rows,
                     taps=tuple((g * cin, base)
                                for g, base in enumerate(groups)))
    return w_all, bias, cfg


# ----------------------------------------------------------------------------
# DSCUBlcok forward (Pallas conv core + minimal XLA layout glue / PixelShuffle)
# ----------------------------------------------------------------------------
@functools.partial(jax.jit, static_argnames=("cfg",))
def dscu_forward(x_nchw, w_all, bias, *, cfg):
    n, cin, h, w = x_nchw.shape
    pad = cfg.pad
    extra = cfg.hp - cfg.h - 2 * pad
    c4 = cfg.n_br * cfg.cout

    # Pad once with the max pad; flatten spatial so taps are contiguous slices.
    xp = jnp.pad(x_nchw, ((0, 0), (0, 0), (pad, pad + extra), (pad, pad)))
    x_flat = xp.reshape(n, cin, cfg.l_img)

    kernel = functools.partial(_fused_aspp_kernel, cfg=cfg)
    conv = pl.pallas_call(
        kernel,
        out_shape=jax.ShapeDtypeStruct((n, c4, cfg.span), jnp.float32),
        grid_spec=pltpu.PrefetchScalarGridSpec(
            num_scalar_prefetch=0,
            grid=(1,),
            in_specs=[
                pl.BlockSpec((n, cin, cfg.l_img), lambda i: (0, 0, 0)),
                pl.BlockSpec((c4, cfg.k_rows), lambda i: (0, 0)),
                pl.BlockSpec((c4, 1), lambda i: (0, 0)),
            ],
            out_specs=pl.BlockSpec((n, c4, cfg.span), lambda i: (0, 0, 0)),
            scratch_shapes=[pltpu.VMEM((cfg.k_rows, n * cfg.span),
                                       jnp.float32)],
        ),
        compiler_params=pltpu.CompilerParams(
            dimension_semantics=("arbitrary",),
            vmem_limit_bytes=8 * 1024 * 1024),
    )(x_flat, w_all, bias)

    # Strip the (Wp - W) garbage columns + PixelShuffle(2), PyTorch semantics.
    cat = conv.reshape(n, c4, cfg.h, cfg.wp)[:, :, :, :cfg.w]
    r = 2
    c = c4 // (r * r)
    y = cat.reshape(n, c, r, r, cfg.h, cfg.w)
    y = jnp.transpose(y, (0, 1, 4, 2, 5, 3))
    return y.reshape(n, c, cfg.h * r, cfg.w * r)           # (N, C, 2H, 2W)


# ----------------------------------------------------------------------------
# Pure-JAX reference (lax.conv) for correctness check
# ----------------------------------------------------------------------------
def dscu_reference(x_nchw, branch_params, dilations, eps=1e-5):
    outs = []
    for (w_hwio, gamma, beta, mean, var), d in zip(branch_params, dilations):
        K = w_hwio.shape[0]
        pad = K // 2 if d == 1 else d
        w_oihw = jnp.transpose(w_hwio, (3, 2, 0, 1))
        y = jax.lax.conv_general_dilated(
            x_nchw, w_oihw, window_strides=(1, 1),
            padding=[(pad, pad), (pad, pad)],
            rhs_dilation=(d, d),
            dimension_numbers=('NCHW', 'OIHW', 'NCHW'))
        y = (y - mean[None, :, None, None]) / jnp.sqrt(var + eps)[None, :, None, None]
        y = y * gamma[None, :, None, None] + beta[None, :, None, None]
        y = jnp.maximum(y, 0.0)
        outs.append(y)
    cat = jnp.concatenate(outs, axis=1)
    N, C4, H, W = cat.shape
    r = 2
    C = C4 // (r * r)
    y = cat.reshape(N, C, r, r, H, W)
    y = jnp.transpose(y, (0, 1, 4, 2, 5, 3))
    return y.reshape(N, C, H * r, W * r)


# ----------------------------------------------------------------------------
# Deterministic parameter construction (synthetic, no checkpoint)
# ----------------------------------------------------------------------------
def make_params(key, in_channels, channels, dilations):
    params = []
    for i, d in enumerate(dilations):
        K = 1 if d == 1 else 3
        key, kw = jax.random.split(key)
        w_hwio = 0.1 * jax.random.normal(kw, (K, K, in_channels, channels),
                                         dtype=jnp.float32)
        gamma = 0.5 + 0.1 * jnp.arange(channels, dtype=jnp.float32)
        beta = 0.01 * (jnp.arange(channels, dtype=jnp.float32) - channels / 2) + 0.02 * i
        mean = 0.05 * jnp.arange(channels, dtype=jnp.float32) - 0.1 * i
        var = 1.0 + 0.1 * jnp.arange(channels, dtype=jnp.float32)
        params.append((w_hwio, gamma, beta, mean, var))
    return params


if __name__ == "__main__":
    N, in_channels, channels = 2, 4, 8
    H = W = 16
    dilations = [1, 3, 6, 12]

    key = jax.random.PRNGKey(0)
    kx, kp = jax.random.split(key)
    x = jax.random.normal(kx, (N, in_channels, H, W), dtype=jnp.float32)
    branch_params = make_params(kp, in_channels, channels, dilations)

    # Fused weight slab / bias / geometry built once on the host (numpy).
    w_all, bias, cfg = prepare_dscu(branch_params, dilations, N,
                                    in_channels, channels, H, W)

    out = dscu_forward(x, jnp.asarray(w_all), jnp.asarray(bias), cfg=cfg)
    out = jax.block_until_ready(out)

    ref = jax.block_until_ready(dscu_reference(x, branch_params, dilations))

    assert out.shape == (N, channels, 2 * H, 2 * W), out.shape
    np.testing.assert_allclose(np.asarray(out), np.asarray(ref),
                               rtol=1e-4, atol=1e-4)
    print("KERNEL_OK")
</pallas_src>

<mosaic_0001>
module attributes {stable_mosaic.version = 11 : i64} {
  func.func @_fused_aspp_kernel(%arg0: i32, %arg1: memref<2x4x1640xf32, #tpu.memory_space<vmem>>, %arg2: memref<32x100xf32, #tpu.memory_space<vmem>>, %arg3: memref<32x1xf32, #tpu.memory_space<vmem>>, %arg4: memref<2x32x640xf32, #tpu.memory_space<vmem>>, %arg5: memref<100x1280xf32, #tpu.memory_space<vmem>>) attributes {dimension_semantics = [#tpu.dimension_semantics<arbitrary>], iteration_bounds = array<i64: 1>, scalar_prefetch = 0 : i64, scratch_operands = 1 : i64, tpu.core_type = #tpu.core_type<tc>, window_params = [{pipeline_mode = #tpu.pipeline_mode<synchronous>, transform_indices = @transform_0, window_bounds = array<i64: 2, 4, 1640>}, {pipeline_mode = #tpu.pipeline_mode<synchronous>, transform_indices = @transform_1, window_bounds = array<i64: 32, 100>}, {pipeline_mode = #tpu.pipeline_mode<synchronous>, transform_indices = @transform_2, window_bounds = array<i64: 32, 1>}, {pipeline_mode = #tpu.pipeline_mode<synchronous>, transform_indices = @transform_3, window_bounds = array<i64: 2, 32, 640>}]} {
    %c0 = arith.constant 0 : index
    %c0_0 = arith.constant 0 : index
    %c492 = arith.constant 492 : index
    %0 = vector.load %arg1[%c0, %c0_0, %c492] : memref<2x4x1640xf32, #tpu.memory_space<vmem>>, vector<1x4x640xf32>
    %1 = vector.shape_cast %0 : vector<1x4x640xf32> to vector<4x640xf32>
    %c0_1 = arith.constant 0 : index
    %c0_2 = arith.constant 0 : index
    %c369 = arith.constant 369 : index
    %2 = vector.load %arg1[%c0_1, %c0_2, %c369] : memref<2x4x1640xf32, #tpu.memory_space<vmem>>, vector<1x4x640xf32>
    %3 = vector.shape_cast %2 : vector<1x4x640xf32> to vector<4x640xf32>
    %4 = tpu.concatenate %1, %3 in 0 : vector<4x640xf32>, vector<4x640xf32> -> vector<8x640xf32>
    %c0_3 = arith.constant 0 : index
    %c0_4 = arith.constant 0 : index
    %5 = vector.load %arg5[%c0_3, %c0_4] : memref<100x1280xf32, #tpu.memory_space<vmem>>, vector<8x640xf32>
    tpu.vector_store %arg5[%c0_3, %c0_4], %4 {strides = array<i32>} : memref<100x1280xf32, #tpu.memory_space<vmem>>, vector<8x640xf32>,
    %c0_5 = arith.constant 0 : index
    %c0_6 = arith.constant 0 : index
    %c372 = arith.constant 372 : index
    %6 = vector.load %arg1[%c0_5, %c0_6, %c372] : memref<2x4x1640xf32, #tpu.memory_space<vmem>>, vector<1x4x640xf32>
    %7 = vector.shape_cast %6 : vector<1x4x640xf32> to vector<4x640xf32>
    %c0_7 = arith.constant 0 : index
    %c0_8 = arith.constant 0 : index
    %c375 = arith.constant 375 : index
    %8 = vector.load %arg1[%c0_7, %c0_8, %c375] : memref<2x4x1640xf32, #tpu.memory_space<vmem>>, vector<1x4x640xf32>
    %9 = vector.shape_cast %8 : vector<1x4x640xf32> to vector<4x640xf32>
    %10 = tpu.concatenate %7, %9 in 0 : vector<4x640xf32>, vector<4x640xf32> -> vector<8x640xf32>
    %c8 = arith.constant 8 : index
    %c0_9 = arith.constant 0 : index
    %11 = vector.load %arg5[%c8, %c0_9] : memref<100x1280xf32, #tpu.memory_space<vmem>>, vector<8x640xf32>
    tpu.vector_store %arg5[%c8, %c0_9], %10 {strides = array<i32>} : memref<100x1280xf32, #tpu.memory_space<vmem>>, vector<8x640xf32>,
    %c0_10 = arith.constant 0 : index
    %c0_11 = arith.constant 0 : index
    %c489 = arith.constant 489 : index
    %12 = vector.load %arg1[%c0_10, %c0_11, %c489] : memref<2x4x1640xf32, #tpu.memory_space<vmem>>, vector<1x4x640xf32>
    %13 = vector.shape_cast %12 : vector<1x4x640xf32> to vector<4x640xf32>
    %c0_12 = arith.constant 0 : index
    %c0_13 = arith.constant 0 : index
    %c495 = arith.constant 495 : index
    %14 = vector.load %arg1[%c0_12, %c0_13, %c495] : memref<2x4x1640xf32, #tpu.memory_space<vmem>>, vector<1x4x640xf32>
    %15 = vector.shape_cast %14 : vector<1x4x640xf32> to vector<4x640xf32>
    %16 = tpu.concatenate %13, %15 in 0 : vector<4x640xf32>, vector<4x640xf32> -> vector<8x640xf32>
    %c16 = arith.constant 16 : index
    %c0_14 = arith.constant 0 : index
    %17 = vector.load %arg5[%c16, %c0_14] : memref<100x1280xf32, #tpu.memory_space<vmem>>, vector<8x640xf32>
    tpu.vector_store %arg5[%c16, %c0_14], %16 {strides = array<i32>} : memref<100x1280xf32, #tpu.memory_space<vmem>>, vector<8x640xf32>,
    %c0_15 = arith.constant 0 : index
    %c0_16 = arith.constant 0 : index
    %c609 = arith.constant 609 : index
    %18 = vector.load %arg1[%c0_15, %c0_16, %c609] : memref<2x4x1640xf32, #tpu.memory_space<vmem>>, vector<1x4x640xf32>
    %19 = vector.shape_cast %18 : vector<1x4x640xf32> to vector<4x640xf32>
    %c0_17 = arith.constant 0 : index
    %c0_18 = arith.constant 0 : index
    %c612 = arith.constant 612 : index
    %20 = vector.load %arg1[%c0_17, %c0_18, %c612] : memref<2x4x1640xf32, #tpu.memory_space<vmem>>, vector<1x4x640xf32>
    %21 = vector.shape_cast %20 : vector<1x4x640xf32> to vector<4x640xf32>
    %22 = tpu.concatenate %19, %21 in 0 : vector<4x640xf32>, vector<4x640xf32> -> vector<8x640xf32>
    %c24 = arith.constant 24 : index
    %c0_19 = arith.constant 0 : index
    %23 = vector.load %arg5[%c24, %c0_19] : memref<100x1280xf32, #tpu.memory_space<vmem>>, vector<8x640xf32>
    tpu.vector_store %arg5[%c24, %c0_19], %22 {strides = array<i32>} : memref<100x1280xf32, #tpu.memory_space<vmem>>, vector<8x640xf32>,
    %c0_20 = arith.constant 0 : index
    %c0_21 = arith.constant 0 : index
    %c615 = arith.constant 615 : index
    %24 = vector.load %arg1[%c0_20, %c0_21, %c615] : memref<2x4x1640xf32, #tpu.memory_space<vmem>>, vector<1x4x640xf32>
    %25 = vector.shape_cast %24 : vector<1x4x640xf32> to vector<4x640xf32>
    %c0_22 = arith.constant 0 : index
    %c0_23 = arith.constant 0 : index
    %c246 = arith.constant 246 : index
    %26 = vector.load %arg1[%c0_22, %c0_23, %c246] : memref<2x4x1640xf32, #tpu.memory_space<vmem>>, vector<1x4x640xf32>
    %27 = vector.shape_cast %26 : vector<1x4x640xf32> to vector<4x640xf32>
    %28 = tpu.concatenate %25, %27 in 0 : vector<4x640xf32>, vector<4x640xf32> -> vector<8x640xf32>
    %c32 = arith.constant 32 : index
    %c0_24 = arith.constant 0 : index
    %29 = vector.load %arg5[%c32, %c0_24] : memref<100x1280xf32, #tpu.memory_space<vmem>>, vector<8x640xf32>
    tpu.vector_store %arg5[%c32, %c0_24], %28 {strides = array<i32>} : memref<100x1280xf32, #tpu.memory_space<vmem>>, vector<8x640xf32>,
    %c0_25 = arith.constant 0 : index
    %c0_26 = arith.constant 0 : index
    %c252 = arith.constant 252 : index
    %30 = vector.load %arg1[%c0_25, %c0_26, %c252] : memref<2x4x1640xf32, #tpu.memory_space<vmem>>, vector<1x4x640xf32>
    %31 = vector.shape_cast %30 : vector<1x4x640xf32> to vector<4x640xf32>
    %c0_27 = arith.constant 0 : index
    %c0_28 = arith.constant 0 : index
    %c258 = arith.constant 258 : index
    %32 = vector.load %arg1[%c0_27, %c0_28, %c258] : memref<2x4x1640xf32, #tpu.memory_space<vmem>>, vector<1x4x640xf32>
    %33 = vector.shape_cast %32 : vector<1x4x640xf32> to vector<4x640xf32>
    %34 = tpu.concatenate %31, %33 in 0 : vector<4x640xf32>, vector<4x640xf32> -> vector<8x640xf32>
    %c40 = arith.constant 40 : index
    %c0_29 = arith.constant 0 : index
    %35 = vector.load %arg5[%c40, %c0_29] : memref<100x1280xf32, #tpu.memory_space<vmem>>, vector<8x640xf32>
    tpu.vector_store %arg5[%c40, %c0_29], %34 {strides = array<i32>} : memref<100x1280xf32, #tpu.memory_space<vmem>>, vector<8x640xf32>,
    %c0_30 = arith.constant 0 : index
    %c0_31 = arith.constant 0 : index
    %c486 = arith.constant 486 : index
    %36 = vector.load %arg1[%c0_30, %c0_31, %c486] : memref<2x4x1640xf32, #tpu.memory_space<vmem>>, vector<1x4x640xf32>
    %37 = vector.shape_cast %36 : vector<1x4x640xf32> to vector<4x640xf32>
    %c0_32 = arith.constant 0 : index
    %c0_33 = arith.constant 0 : index
    %c498 = arith.constant 498 : index
    %38 = vector.load %arg1[%c0_32, %c0_33, %c498] : memref<2x4x1640xf32, #tpu.memory_space<vmem>>, vector<1x4x640xf32>
    %39 = vector.shape_cast %38 : vector<1x4x640xf32> to vector<4x640xf32>
    %40 = tpu.concatenate %37, %39 in 0 : vector<4x640xf32>, vector<4x640xf32> -> vector<8x640xf32>
    %c48 = arith.constant 48 : index
    %c0_34 = arith.constant 0 : index
    %41 = vector.load %arg5[%c48, %c0_34] : memref<100x1280xf32, #tpu.memory_space<vmem>>, vector<8x640xf32>
    tpu.vector_store %arg5[%c48, %c0_34], %40 {strides = array<i32>} : memref<100x1280xf32, #tpu.memory_space<vmem>>, vector<8x640xf32>,
    %c0_35 = arith.constant 0 : index
    %c0_36 = arith.constant 0 : index
    %c726 = arith.constant 726 : index
    %42 = vector.load %arg1[%c0_35, %c0_36, %c726] : memref<2x4x1640xf32, #tpu.memory_space<vmem>>, vector<1x4x640xf32>
    %43 = vector.shape_cast %42 : vector<1x4x640xf32> to vector<4x640xf32>
    %c0_37 = arith.constant 0 : index
    %c0_38 = arith.constant 0 : index
    %c732 = arith.constant 732 : index
    %44 = vector.load %arg1[%c0_37, %c0_38, %c732] : memref<2x4x1640xf32, #tpu.memory_space<vmem>>, vector<1x4x640xf32>
    %45 = vector.shape_cast %44 : vector<1x4x640xf32> to vector<4x640xf32>
    %46 = tpu.concatenate %43, %45 in 0 : vector<4x640xf32>, vector<4x640xf32> -> vector<8x640xf32>
    %c56 = arith.constant 56 : index
    %c0_39 = arith.constant 0 : index
    %47 = vector.load %arg5[%c56, %c0_39] : memref<100x1280xf32, #tpu.memory_space<vmem>>, vector<8x640xf32>
    tpu.vector_store %arg5[%c56, %c0_39], %46 {strides = array<i32>} : memref<100x1280xf32, #tpu.memory_space<vmem>>, vector<8x640xf32>,
    %c0_40 = arith.constant 0 : index
    %c0_41 = arith.constant 0 : index
    %c738 = arith.constant 738 : index
    %48 = vector.load %arg1[%c0_40, %c0_41, %c738] : memref<2x4x1640xf32, #tpu.memory_space<vmem>>, vector<1x4x640xf32>
    %49 = vector.shape_cast %48 : vector<1x4x640xf32> to vector<4x640xf32>
    %c0_42 = arith.constant 0 : index
    %c0_43 = arith.constant 0 : index
    %c0_44 = arith.constant 0 : index
    %50 = vector.load %arg1[%c0_42, %c0_43, %c0_44] : memref<2x4x1640xf32, #tpu.memory_space<vmem>>, vector<1x4x640xf32>
    %51 = vector.shape_cast %50 : vector<1x4x640xf32> to vector<4x640xf32>
    %52 = tpu.concatenate %49, %51 in 0 : vector<4x640xf32>, vector<4x640xf32> -> vector<8x640xf32>
    %c64 = arith.constant 64 : index
    %c0_45 = arith.constant 0 : index
    %53 = vector.load %arg5[%c64, %c0_45] : memref<100x1280xf32, #tpu.memory_space<vmem>>, vector<8x640xf32>
    tpu.vector_store %arg5[%c64, %c0_45], %52 {strides = array<i32>} : memref<100x1280xf32, #tpu.memory_space<vmem>>, vector<8x640xf32>,
    %c0_46 = arith.constant 0 : index
    %c0_47 = arith.constant 0 : index
    %c12 = arith.constant 12 : index
    %54 = vector.load %arg1[%c0_46, %c0_47, %c12] : memref<2x4x1640xf32, #tpu.memory_space<vmem>>, vector<1x4x640xf32>
    %55 = vector.shape_cast %54 : vector<1x4x640xf32> to vector<4x640xf32>
    %c0_48 = arith.constant 0 : index
    %c0_49 = arith.constant 0 : index
    %c24_50 = arith.constant 24 : index
    %56 = vector.load %arg1[%c0_48, %c0_49, %c24_50] : memref<2x4x1640xf32, #tpu.memory_space<vmem>>, vector<1x4x640xf32>
    %57 = vector.shape_cast %56 : vector<1x4x640xf32> to vector<4x640xf32>
    %58 = tpu.concatenate %55, %57 in 0 : vector<4x640xf32>, vector<4x640xf32> -> vector<8x640xf32>
    %c72 = arith.constant 72 : index
    %c0_51 = arith.constant 0 : index
    %59 = vector.load %arg5[%c72, %c0_51] : memref<100x1280xf32, #tpu.memory_space<vmem>>, vector<8x640xf32>
    tpu.vector_store %arg5[%c72, %c0_51], %58 {strides = array<i32>} : memref<100x1280xf32, #tpu.memory_space<vmem>>, vector<8x640xf32>,
    %c0_52 = arith.constant 0 : index
    %c0_53 = arith.constant 0 : index
    %c480 = arith.constant 480 : index
    %60 = vector.load %arg1[%c0_52, %c0_53, %c480] : memref<2x4x1640xf32, #tpu.memory_space<vmem>>, vector<1x4x640xf32>
    %61 = vector.shape_cast %60 : vector<1x4x640xf32> to vector<4x640xf32>
    %c0_54 = arith.constant 0 : index
    %c0_55 = arith.constant 0 : index
    %c504 = arith.constant 504 : index
    %62 = vector.load %arg1[%c0_54, %c0_55, %c504] : memref<2x4x1640xf32, #tpu.memory_space<vmem>>, vector<1x4x640xf32>
    %63 = vector.shape_cast %62 : vector<1x4x640xf32> to vector<4x640xf32>
    %64 = tpu.concatenate %61, %63 in 0 : vector<4x640xf32>, vector<4x640xf32> -> vector<8x640xf32>
    %c80 = arith.constant 80 : index
    %c0_56 = arith.constant 0 : index
    %65 = vector.load %arg5[%c80, %c0_56] : memref<100x1280xf32, #tpu.memory_space<vmem>>, vector<8x640xf32>
    tpu.vector_store %arg5[%c80, %c0_56], %64 {strides = array<i32>} : memref<100x1280xf32, #tpu.memory_space<vmem>>, vector<8x640xf32>,
    %c0_57 = arith.constant 0 : index
    %c0_58 = arith.constant 0 : index
    %c960 = arith.constant 960 : index
    %66 = vector.load %arg1[%c0_57, %c0_58, %c960] : memref<2x4x1640xf32, #tpu.memory_space<vmem>>, vector<1x4x640xf32>
    %67 = vector.shape_cast %66 : vector<1x4x640xf32> to vector<4x640xf32>
    %c0_59 = arith.constant 0 : index
    %c0_60 = arith.constant 0 : index
    %c972 = arith.constant 972 : index
    %68 = vector.load %arg1[%c0_59, %c0_60, %c972] : memref<2x4x1640xf32, #tpu.memory_space<vmem>>, vector<1x4x640xf32>
    %69 = vector.shape_cast %68 : vector<1x4x640xf32> to vector<4x640xf32>
    %70 = tpu.concatenate %67, %69 in 0 : vector<4x640xf32>, vector<4x640xf32> -> vector<8x640xf32>
    %c88 = arith.constant 88 : index
    %c0_61 = arith.constant 0 : index
    %71 = vector.load %arg5[%c88, %c0_61] : memref<100x1280xf32, #tpu.memory_space<vmem>>, vector<8x640xf32>
    tpu.vector_store %arg5[%c88, %c0_61], %70 {strides = array<i32>} : memref<100x1280xf32, #tpu.memory_space<vmem>>, vector<8x640xf32>,
    %c0_62 = arith.constant 0 : index
    %c0_63 = arith.constant 0 : index
    %c984 = arith.constant 984 : index
    %72 = vector.load %arg1[%c0_62, %c0_63, %c984] : memref<2x4x1640xf32, #tpu.memory_space<vmem>>, vector<1x4x640xf32>
    %73 = vector.shape_cast %72 : vector<1x4x640xf32> to vector<4x640xf32>
    %c96 = arith.constant 96 : index
    %c0_64 = arith.constant 0 : index
    %74 = vector.load %arg5[%c96, %c0_64] : memref<100x1280xf32, #tpu.memory_space<vmem>>, vector<4x640xf32>
    tpu.vector_store %arg5[%c96, %c0_64], %73 {strides = array<i32>} : memref<100x1280xf32, #tpu.memory_space<vmem>>, vector<4x640xf32>,
    %c1 = arith.constant 1 : index
    %c0_65 = arith.constant 0 : index
    %c492_66 = arith.constant 492 : index
    %75 = vector.load %arg1[%c1, %c0_65, %c492_66] : memref<2x4x1640xf32, #tpu.memory_space<vmem>>, vector<1x4x640xf32>
    %76 = vector.shape_cast %75 : vector<1x4x640xf32> to vector<4x640xf32>
    %c1_67 = arith.constant 1 : index
    %c0_68 = arith.constant 0 : index
    %c369_69 = arith.constant 369 : index
    %77 = vector.load %arg1[%c1_67, %c0_68, %c369_69] : memref<2x4x1640xf32, #tpu.memory_space<vmem>>, vector<1x4x640xf32>
    %78 = vector.shape_cast %77 : vector<1x4x640xf32> to vector<4x640xf32>
    %79 = tpu.concatenate %76, %78 in 0 : vector<4x640xf32>, vector<4x640xf32> -> vector<8x640xf32>
    %c0_70 = arith.constant 0 : index
    %c640 = arith.constant 640 : index
    %80 = vector.load %arg5[%c0_70, %c640] : memref<100x1280xf32, #tpu.memory_space<vmem>>, vector<8x640xf32>
    tpu.vector_store %arg5[%c0_70, %c640], %79 {strides = array<i32>} : memref<100x1280xf32, #tpu.memory_space<vmem>>, vector<8x640xf32>,
    %c1_71 = arith.constant 1 : index
    %c0_72 = arith.constant 0 : index
    %c372_73 = arith.constant 372 : index
    %81 = vector.load %arg1[%c1_71, %c0_72, %c372_73] : memref<2x4x1640xf32, #tpu.memory_space<vmem>>, vector<1x4x640xf32>
    %82 = vector.shape_cast %81 : vector<1x4x640xf32> to vector<4x640xf32>
    %c1_74 = arith.constant 1 : index
    %c0_75 = arith.constant 0 : index
    %c375_76 = arith.constant 375 : index
    %83 = vector.load %arg1[%c1_74, %c0_75, %c375_76] : memref<2x4x1640xf32, #tpu.memory_space<vmem>>, vector<1x4x640xf32>
    %84 = vector.shape_cast %83 : vector<1x4x640xf32> to vector<4x640xf32>
    %85 = tpu.concatenate %82, %84 in 0 : vector<4x640xf32>, vector<4x640xf32> -> vector<8x640xf32>
    %c8_77 = arith.constant 8 : index
    %c640_78 = arith.constant 640 : index
    %86 = vector.load %arg5[%c8_77, %c640_78] : memref<100x1280xf32, #tpu.memory_space<vmem>>, vector<8x640xf32>
    tpu.vector_store %arg5[%c8_77, %c640_78], %85 {strides = array<i32>} : memref<100x1280xf32, #tpu.memory_space<vmem>>, vector<8x640xf32>,
    %c1_79 = arith.constant 1 : index
    %c0_80 = arith.constant 0 : index
    %c489_81 = arith.constant 489 : index
    %87 = vector.load %arg1[%c1_79, %c0_80, %c489_81] : memref<2x4x1640xf32, #tpu.memory_space<vmem>>, vector<1x4x640xf32>
    %88 = vector.shape_cast %87 : vector<1x4x640xf32> to vector<4x640xf32>
    %c1_82 = arith.constant 1 : index
    %c0_83 = arith.constant 0 : index
    %c495_84 = arith.constant 495 : index
    %89 = vector.load %arg1[%c1_82, %c0_83, %c495_84] : memref<2x4x1640xf32, #tpu.memory_space<vmem>>, vector<1x4x640xf32>
    %90 = vector.shape_cast %89 : vector<1x4x640xf32> to vector<4x640xf32>
    %91 = tpu.concatenate %88, %90 in 0 : vector<4x640xf32>, vector<4x640xf32> -> vector<8x640xf32>
    %c16_85 = arith.constant 16 : index
    %c640_86 = arith.constant 640 : index
    %92 = vector.load %arg5[%c16_85, %c640_86] : memref<100x1280xf32, #tpu.memory_space<vmem>>, vector<8x640xf32>
    tpu.vector_store %arg5[%c16_85, %c640_86], %91 {strides = array<i32>} : memref<100x1280xf32, #tpu.memory_space<vmem>>, vector<8x640xf32>,
    %c1_87 = arith.constant 1 : index
    %c0_88 = arith.constant 0 : index
    %c609_89 = arith.constant 609 : index
    %93 = vector.load %arg1[%c1_87, %c0_88, %c609_89] : memref<2x4x1640xf32, #tpu.memory_space<vmem>>, vector<1x4x640xf32>
    %94 = vector.shape_cast %93 : vector<1x4x640xf32> to vector<4x640xf32>
    %c1_90 = arith.constant 1 : index
    %c0_91 = arith.constant 0 : index
    %c612_92 = arith.constant 612 : index
    %95 = vector.load %arg1[%c1_90, %c0_91, %c612_92] : memref<2x4x1640xf32, #tpu.memory_space<vmem>>, vector<1x4x640xf32>
    %96 = vector.shape_cast %95 : vector<1x4x640xf32> to vector<4x640xf32>
    %97 = tpu.concatenate %94, %96 in 0 : vector<4x640xf32>, vector<4x640xf32> -> vector<8x640xf32>
    %c24_93 = arith.constant 24 : index
    %c640_94 = arith.constant 640 : index
    %98 = vector.load %arg5[%c24_93, %c640_94] : memref<100x1280xf32, #tpu.memory_space<vmem>>, vector<8x640xf32>
    tpu.vector_store %arg5[%c24_93, %c640_94], %97 {strides = array<i32>} : memref<100x1280xf32, #tpu.memory_space<vmem>>, vector<8x640xf32>,
    %c1_95 = arith.constant 1 : index
    %c0_96 = arith.constant 0 : index
    %c615_97 = arith.constant 615 : index
    %99 = vector.load %arg1[%c1_95, %c0_96, %c615_97] : memref<2x4x1640xf32, #tpu.memory_space<vmem>>, vector<1x4x640xf32>
    %100 = vector.shape_cast %99 : vector<1x4x640xf32> to vector<4x640xf32>
    %c1_98 = arith.constant 1 : index
    %c0_99 = arith.constant 0 : index
    %c246_100 = arith.constant 246 : index
    %101 = vector.load %arg1[%c1_98, %c0_99, %c246_100] : memref<2x4x1640xf32, #tpu.memory_space<vmem>>, vector<1x4x640xf32>
    %102 = vector.shape_cast %101 : vector<1x4x640xf32> to vector<4x640xf32>
    %103 = tpu.concatenate %100, %102 in 0 : vector<4x640xf32>, vector<4x640xf32> -> vector<8x640xf32>
    %c32_101 = arith.constant 32 : index
    %c640_102 = arith.constant 640 : index
    %104 = vector.load %arg5[%c32_101, %c640_102] : memref<100x1280xf32, #tpu.memory_space<vmem>>, vector<8x640xf32>
    tpu.vector_store %arg5[%c32_101, %c640_102], %103 {strides = array<i32>} : memref<100x1280xf32, #tpu.memory_space<vmem>>, vector<8x640xf32>,
    %c1_103 = arith.constant 1 : index
    %c0_104 = arith.constant 0 : index
    %c252_105 = arith.constant 252 : index
    %105 = vector.load %arg1[%c1_103, %c0_104, %c252_105] : memref<2x4x1640xf32, #tpu.memory_space<vmem>>, vector<1x4x640xf32>
    %106 = vector.shape_cast %105 : vector<1x4x640xf32> to vector<4x640xf32>
    %c1_106 = arith.constant 1 : index
    %c0_107 = arith.constant 0 : index
    %c258_108 = arith.constant 258 : index
    %107 = vector.load %arg1[%c1_106, %c0_107, %c258_108] : memref<2x4x1640xf32, #tpu.memory_space<vmem>>, vector<1x4x640xf32>
    %108 = vector.shape_cast %107 : vector<1x4x640xf32> to vector<4x640xf32>
    %109 = tpu.concatenate %106, %108 in 0 : vector<4x640xf32>, vector<4x640xf32> -> vector<8x640xf32>
    %c40_109 = arith.constant 40 : index
    %c640_110 = arith.constant 640 : index
    %110 = vector.load %arg5[%c40_109, %c640_110] : memref<100x1280xf32, #tpu.memory_space<vmem>>, vector<8x640xf32>
    tpu.vector_store %arg5[%c40_109, %c640_110], %109 {strides = array<i32>} : memref<100x1280xf32, #tpu.memory_space<vmem>>, vector<8x640xf32>,
    %c1_111 = arith.constant 1 : index
    %c0_112 = arith.constant 0 : index
    %c486_113 = arith.constant 486 : index
    %111 = vector.load %arg1[%c1_111, %c0_112, %c486_113] : memref<2x4x1640xf32, #tpu.memory_space<vmem>>, vector<1x4x640xf32>
    %112 = vector.shape_cast %111 : vector<1x4x640xf32> to vector<4x640xf32>
    %c1_114 = arith.constant 1 : index
    %c0_115 = arith.constant 0 : index
    %c498_116 = arith.constant 498 : index
    %113 = vector.load %arg1[%c1_114, %c0_115, %c498_116] : memref<2x4x1640xf32, #tpu.memory_space<vmem>>, vector<1x4x640xf32>
    %114 = vector.shape_cast %113 : vector<1x4x640xf32> to vector<4x640xf32>
    %115 = tpu.concatenate %112, %114 in 0 : vector<4x640xf32>, vector<4x640xf32> -> vector<8x640xf32>
    %c48_117 = arith.constant 48 : index
    %c640_118 = arith.constant 640 : index
    %116 = vector.load %arg5[%c48_117, %c640_118] : memref<100x1280xf32, #tpu.memory_space<vmem>>, vector<8x640xf32>
    tpu.vector_store %arg5[%c48_117, %c640_118], %115 {strides = array<i32>} : memref<100x1280xf32, #tpu.memory_space<vmem>>, vector<8x640xf32>,
    %c1_119 = arith.constant 1 : index
    %c0_120 = arith.constant 0 : index
    %c726_121 = arith.constant 726 : index
    %117 = vector.load %arg1[%c1_119, %c0_120, %c726_121] : memref<2x4x1640xf32, #tpu.memory_space<vmem>>, vector<1x4x640xf32>
    %118 = vector.shape_cast %117 : vector<1x4x640xf32> to vector<4x640xf32>
    %c1_122 = arith.constant 1 : index
    %c0_123 = arith.constant 0 : index
    %c732_124 = arith.constant 732 : index
    %119 = vector.load %arg1[%c1_122, %c0_123, %c732_124] : memref<2x4x1640xf32, #tpu.memory_space<vmem>>, vector<1x4x640xf32>
    %120 = vector.shape_cast %119 : vector<1x4x640xf32> to vector<4x640xf32>
    %121 = tpu.concatenate %118, %120 in 0 : vector<4x640xf32>, vector<4x640xf32> -> vector<8x640xf32>
    %c56_125 = arith.constant 56 : index
    %c640_126 = arith.constant 640 : index
    %122 = vector.load %arg5[%c56_125, %c640_126] : memref<100x1280xf32, #tpu.memory_space<vmem>>, vector<8x640xf32>
    tpu.vector_store %arg5[%c56_125, %c640_126], %121 {strides = array<i32>} : memref<100x1280xf32, #tpu.memory_space<vmem>>, vector<8x640xf32>,
    %c1_127 = arith.constant 1 : index
    %c0_128 = arith.constant 0 : index
    %c738_129 = arith.constant 738 : index
    %123 = vector.load %arg1[%c1_127, %c0_128, %c738_129] : memref<2x4x1640xf32, #tpu.memory_space<vmem>>, vector<1x4x640xf32>
    %124 = vector.shape_cast %123 : vector<1x4x640xf32> to vector<4x640xf32>
    %c1_130 = arith.constant 1 : index
    %c0_131 = arith.constant 0 : index
    %c0_132 = arith.constant 0 : index
    %125 = vector.load %arg1[%c1_130, %c0_131, %c0_132] : memref<2x4x1640xf32, #tpu.memory_space<vmem>>, vector<1x4x640xf32>
    %126 = vector.shape_cast %125 : vector<1x4x640xf32> to vector<4x640xf32>
    %127 = tpu.concatenate %124, %126 in 0 : vector<4x640xf32>, vector<4x640xf32> -> vector<8x640xf32>
    %c64_133 = arith.constant 64 : index
    %c640_134 = arith.constant 640 : index
    %128 = vector.load %arg5[%c64_133, %c640_134] : memref<100x1280xf32, #tpu.memory_space<vmem>>, vector<8x640xf32>
    tpu.vector_store %arg5[%c64_133, %c640_134], %127 {strides = array<i32>} : memref<100x1280xf32, #tpu.memory_space<vmem>>, vector<8x640xf32>,
    %c1_135 = arith.constant 1 : index
    %c0_136 = arith.constant 0 : index
    %c12_137 = arith.constant 12 : index
    %129 = vector.load %arg1[%c1_135, %c0_136, %c12_137] : memref<2x4x1640xf32, #tpu.memory_space<vmem>>, vector<1x4x640xf32>
    %130 = vector.shape_cast %129 : vector<1x4x640xf32> to vector<4x640xf32>
    %c1_138 = arith.constant 1 : index
    %c0_139 = arith.constant 0 : index
    %c24_140 = arith.constant 24 : index
    %131 = vector.load %arg1[%c1_138, %c0_139, %c24_140] : memref<2x4x1640xf32, #tpu.memory_space<vmem>>, vector<1x4x640xf32>
    %132 = vector.shape_cast %131 : vector<1x4x640xf32> to vector<4x640xf32>
    %133 = tpu.concatenate %130, %132 in 0 : vector<4x640xf32>, vector<4x640xf32> -> vector<8x640xf32>
    %c72_141 = arith.constant 72 : index
    %c640_142 = arith.constant 640 : index
    %134 = vector.load %arg5[%c72_141, %c640_142] : memref<100x1280xf32, #tpu.memory_space<vmem>>, vector<8x640xf32>
    tpu.vector_store %arg5[%c72_141, %c640_142], %133 {strides = array<i32>} : memref<100x1280xf32, #tpu.memory_space<vmem>>, vector<8x640xf32>,
    %c1_143 = arith.constant 1 : index
    %c0_144 = arith.constant 0 : index
    %c480_145 = arith.constant 480 : index
    %135 = vector.load %arg1[%c1_143, %c0_144, %c480_145] : memref<2x4x1640xf32, #tpu.memory_space<vmem>>, vector<1x4x640xf32>
    %136 = vector.shape_cast %135 : vector<1x4x640xf32> to vector<4x640xf32>
    %c1_146 = arith.constant 1 : index
    %c0_147 = arith.constant 0 : index
    %c504_148 = arith.constant 504 : index
    %137 = vector.load %arg1[%c1_146, %c0_147, %c504_148] : memref<2x4x1640xf32, #tpu.memory_space<vmem>>, vector<1x4x640xf32>
    %138 = vector.shape_cast %137 : vector<1x4x640xf32> to vector<4x640xf32>
    %139 = tpu.concatenate %136, %138 in 0 : vector<4x640xf32>, vector<4x640xf32> -> vector<8x640xf32>
    %c80_149 = arith.constant 80 : index
    %c640_150 = arith.constant 640 : index
    %140 = vector.load %arg5[%c80_149, %c640_150] : memref<100x1280xf32, #tpu.memory_space<vmem>>, vector<8x640xf32>
    tpu.vector_store %arg5[%c80_149, %c640_150], %139 {strides = array<i32>} : memref<100x1280xf32, #tpu.memory_space<vmem>>, vector<8x640xf32>,
    %c1_151 = arith.constant 1 : index
    %c0_152 = arith.constant 0 : index
    %c960_153 = arith.constant 960 : index
    %141 = vector.load %arg1[%c1_151, %c0_152, %c960_153] : memref<2x4x1640xf32, #tpu.memory_space<vmem>>, vector<1x4x640xf32>
    %142 = vector.shape_cast %141 : vector<1x4x640xf32> to vector<4x640xf32>
    %c1_154 = arith.constant 1 : index
    %c0_155 = arith.constant 0 : index
    %c972_156 = arith.constant 972 : index
    %143 = vector.load %arg1[%c1_154, %c0_155, %c972_156] : memref<2x4x1640xf32, #tpu.memory_space<vmem>>, vector<1x4x640xf32>
    %144 = vector.shape_cast %143 : vector<1x4x640xf32> to vector<4x640xf32>
    %145 = tpu.concatenate %142, %144 in 0 : vector<4x640xf32>, vector<4x640xf32> -> vector<8x640xf32>
    %c88_157 = arith.constant 88 : index
    %c640_158 = arith.constant 640 : index
    %146 = vector.load %arg5[%c88_157, %c640_158] : memref<100x1280xf32, #tpu.memory_space<vmem>>, vector<8x640xf32>
    tpu.vector_store %arg5[%c88_157, %c640_158], %145 {strides = array<i32>} : memref<100x1280xf32, #tpu.memory_space<vmem>>, vector<8x640xf32>,
    %c1_159 = arith.constant 1 : index
    %c0_160 = arith.constant 0 : index
    %c984_161 = arith.constant 984 : index
    %147 = vector.load %arg1[%c1_159, %c0_160, %c984_161] : memref<2x4x1640xf32, #tpu.memory_space<vmem>>, vector<1x4x640xf32>
    %148 = vector.shape_cast %147 : vector<1x4x640xf32> to vector<4x640xf32>
    %c96_162 = arith.constant 96 : index
    %c640_163 = arith.constant 640 : index
    %149 = vector.load %arg5[%c96_162, %c640_163] : memref<100x1280xf32, #tpu.memory_space<vmem>>, vector<4x640xf32>
    tpu.vector_store %arg5[%c96_162, %c640_163], %148 {strides = array<i32>} : memref<100x1280xf32, #tpu.memory_space<vmem>>, vector<4x640xf32>,
    %c0_164 = arith.constant 0 : index
    %c0_165 = arith.constant 0 : index
    %150 = vector.load %arg2[%c0_164, %c0_165] : memref<32x100xf32, #tpu.memory_space<vmem>>, vector<32x100xf32>
    %c0_166 = arith.constant 0 : index
    %c0_167 = arith.constant 0 : index
    %151 = vector.load %arg5[%c0_166, %c0_167] : memref<100x1280xf32, #tpu.memory_space<vmem>>, vector<100x1280xf32>
    %cst = arith.constant dense<0.000000e+00> : vector<32x1280xf32>
    %152 = tpu.matmul %150, %151, %cst {dimension_numbers = #tpu.dot_dimension_numbers<[1], [0], [0], [1], [0, 0, 1, 1], [], []>} : vector<32x100xf32>, vector<100x1280xf32>, vector<32x1280xf32> -> vector<32x1280xf32>
    %c0_168 = arith.constant 0 : index
    %c0_169 = arith.constant 0 : index
    %153 = vector.load %arg3[%c0_168, %c0_169] : memref<32x1xf32, #tpu.memory_space<vmem>>, vector<32x1xf32>
    %154 = vector.broadcast %153 : vector<32x1xf32> to vector<32x1280xf32>
    %155 = arith.addf %152, %154 : vector<32x1280xf32>
    %cst_170 = arith.constant 0.000000e+00 : f32
    %156 = vector.broadcast %cst_170 : f32 to vector<32x1280xf32>
    %157 = arith.maximumf %155, %156 : vector<32x1280xf32>
    %158 = vector.extract_strided_slice %157 {offsets = [0, 0], sizes = [32, 640], strides = [1, 1]} : vector<32x1280xf32> to vector<32x640xf32>
    %c0_171 = arith.constant 0 : index
    %c0_172 = arith.constant 0 : index
    %c0_173 = arith.constant 0 : index
    %159 = vector.load %arg4[%c0_171, %c0_172, %c0_173] : memref<2x32x640xf32, #tpu.memory_space<vmem>>, vector<1x32x640xf32>
    %160 = vector.shape_cast %159 : vector<1x32x640xf32> to vector<32x640xf32>
    %161 = vector.shape_cast %158 : vector<32x640xf32> to vector<1x32x640xf32>
    tpu.vector_store %arg4[%c0_171, %c0_172, %c0_173], %161 {strides = array<i32>} : memref<2x32x640xf32, #tpu.memory_space<vmem>>, vector<1x32x640xf32>,
    %162 = vector.extract_strided_slice %157 {offsets = [0, 640], sizes = [32, 640], strides = [1, 1]} : vector<32x1280xf32> to vector<32x640xf32>
    %c1_174 = arith.constant 1 : index
    %c0_175 = arith.constant 0 : index
    %c0_176 = arith.constant 0 : index
    %163 = vector.load %arg4[%c1_174, %c0_175, %c0_176] : memref<2x32x640xf32, #tpu.memory_space<vmem>>, vector<1x32x640xf32>
    %164 = vector.shape_cast %163 : vector<1x32x640xf32> to vector<32x640xf32>
    %165 = vector.shape_cast %162 : vector<32x640xf32> to vector<1x32x640xf32>
    tpu.vector_store %arg4[%c1_174, %c0_175, %c0_176], %165 {strides = array<i32>} : memref<2x32x640xf32, #tpu.memory_space<vmem>>, vector<1x32x640xf32>,
    return
  }
  func.func @transform_0(%arg0: i32) -> (i32, i32, i32) {
    %c0_i32 = arith.constant 0 : i32
    %c0_i32_0 = arith.constant 0 : i32
    %c0_i32_1 = arith.constant 0 : i32
    %c0_i32_2 = arith.constant 0 : i32
    return %c0_i32, %c0_i32_0, %c0_i32_1 : i32, i32, i32
  }
  func.func @transform_1(%arg0: i32) -> (i32, i32) {
    %c0_i32 = arith.constant 0 : i32
    %c0_i32_0 = arith.constant 0 : i32
    %c0_i32_1 = arith.constant 0 : i32
    return %c0_i32, %c0_i32_0 : i32, i32
  }
  func.func @transform_2(%arg0: i32) -> (i32, i32) {
    %c0_i32 = arith.constant 0 : i32
    %c0_i32_0 = arith.constant 0 : i32
    %c0_i32_1 = arith.constant 0 : i32
    return %c0_i32, %c0_i32_0 : i32, i32
  }
  func.func @transform_3(%arg0: i32) -> (i32, i32, i32) {
    %c0_i32 = arith.constant 0 : i32
    %c0_i32_0 = arith.constant 0 : i32
    %c0_i32_1 = arith.constant 0 : i32
    %c0_i32_2 = arith.constant 0 : i32
    return %c0_i32, %c0_i32_0, %c0_i32_1 : i32, i32, i32
  }
}

</mosaic_0001>

<llo_original>
// kernel: dscu_forward.1
$region0: #{dscu_forward.1}
  #allocation0 [shape = 'u32[]', space=smem, size = 0x4, offset = 0x4, fixed_abs, tag = 'smem constant byte address 0x4 - core index']
  #allocation1 [shape = 'u32[144,128]{1,0:T(1,128)}', space=vmem, size = 0x12000, scoped, tag = 'internal scratch']
  #allocation2 [shape = 'f32[100,1280]{1,0:T(8,128)}', space=vmem, size = 0x82000, scoped, tag = 'scratch operand']
  %s0 = inlined_call_operand.vmem [shape: f32[2,4,1640], index: 0, kind: input, shape index: {}]
  %s1 = inlined_call_operand.vmem [shape: f32[32,100], index: 1, kind: input, shape index: {}]
  %s2 = inlined_call_operand.vmem [shape: f32[32,1], index: 2, kind: input, shape index: {}]
  %s3 = inlined_call_operand.vmem [shape: f32[2,32,640], index: 3, kind: output, shape index: {}]
  %s4 = sld [smem:[#allocation0]]
  $region22: #{dscu_forward.1} parent=0
    _
  %s6 = ssub.s32 1, %s4
  %s7 = scalar_select 0, %s6, %s4
  // Predicated region
  $region2: #{dscu_forward.1} parent=0 // pred_check
    _
  $region3: #{dscu_forward.1} parent=0 // pred_check_branch
    %9 = sbr.rel (0) target = $region5
  $region4: #{dscu_forward.1} parent=0 // pred_region
    _
  $region5: #{dscu_forward.1} parent=0 // pred_fallthru
    _
  // Predicated region
  $region6: #{dscu_forward.1} parent=0 // pred_check
    _
  $region7: #{dscu_forward.1} parent=0 // pred_check_branch
    %11 = sbr.rel (0) target = $region9
  $region8: #{dscu_forward.1} parent=0 // pred_region
    _
  $region9: #{dscu_forward.1} parent=0 // pred_fallthru
    _
  // Predicated region
  $region10: #{dscu_forward.1} parent=0 // pred_check
    _
  $region11: #{dscu_forward.1} parent=0 // pred_check_branch
    %13 = sbr.rel (0) target = $region13
  $region12: #{dscu_forward.1} parent=0 // pred_region
    _
  $region13: #{dscu_forward.1} parent=0 // pred_fallthru
    _
  %v14 = vld [vmem:[%s0 + $0xc] sm:$0xff]
  %v15 = vld [vmem:[%s0 + $0x14] sm:$0xff]
  %v16 = vld [vmem:[%s0 + $0x1c] sm:$0xff]
  %v17 = vld [vmem:[%s0 + $0x8] sm:$0xff]
  %v18 = vld [vmem:[%s0 + $0x10] sm:$0xff]
  %v19 = vld [vmem:[%s0 + $0x18] sm:$0xff]
  %v23 = vcombine.high %v14, %v14
  %v24 = vcombine.high %v15, %v15
  %v25 = vcombine.high %v16, %v16
  %v32 = vcombine.low %v17, %v17
  %v33 = vcombine.low %v18, %v18
  %v34 = vcombine.low %v19, %v19
  %35 = vrot.lane.b32.xlu0 %v32, 123
  %v36 = vpop.permute.xlu0 %35
  %37 = vrot.lane.b32.xlu0 %v17, 123
  %v38 = vpop.permute.xlu0 %37
  %39 = vrot.lane.b32.xlu0 %v33, 123
  %v40 = vpop.permute.xlu0 %39
  %41 = vrot.lane.b32.xlu0 %v18, 123
  %v42 = vpop.permute.xlu0 %41
  %43 = vrot.lane.b32.xlu0 %v34, 123
  %v44 = vpop.permute.xlu0 %43
  %45 = vrot.lane.b32.xlu0 %v19, 123
  %v46 = vpop.permute.xlu0 %45
  %vm47 = vcmask 1006592
  %v48 = vsel %vm47, %v36, %v38
  %v49 = vsel %vm47, %v38, %v40
  %v50 = vsel %vm47, %v40, %v42
  %v51 = vsel %vm47, %v42, %v44
  %v52 = vsel %vm47, %v44, %v46
  %vm59 = vcmask 1043456
  %v60 = vsel %vm59, %v14, %v48
  %v61 = vsel %vm59, %v23, %v49
  %v62 = vsel %vm59, %v15, %v50
  %v63 = vsel %vm59, %v24, %v51
  %v64 = vsel %vm59, %v16, %v52
  %v65 = vsel %vm59, %v25, %v46
  %72 = vrot.lane.b32.xlu0 %v60, 20
  %v73 = vpop.permute.xlu0 %72
  %74 = vrot.lane.b32.xlu0 %v61, 20
  %v75 = vpop.permute.xlu0 %74
  %76 = vrot.lane.b32.xlu0 %v62, 20
  %v77 = vpop.permute.xlu0 %76
  %78 = vrot.lane.b32.xlu0 %v63, 20
  %v79 = vpop.permute.xlu0 %78
  %80 = vrot.lane.b32.xlu0 %v64, 20
  %v81 = vpop.permute.xlu0 %80
  %82 = vrot.lane.b32.xlu0 %v65, 20
  %v83 = vpop.permute.xlu0 %82
  %vm84 = vcmask 162816
  %v85 = vsel %vm84, %v73, %v75
  %v86 = vsel %vm84, %v75, %v77
  %v87 = vsel %vm84, %v77, %v79
  %v88 = vsel %vm84, %v79, %v81
  %v89 = vsel %vm84, %v81, %v83
  %95 = vst [vmem:[#allocation2] sm:$0xff] %v85
  %96 = vst [vmem:[#allocation2 + $0x8] sm:$0xff] %v86
  %97 = vst [vmem:[#allocation2 + $0x10] sm:$0xff] %v87
  %98 = vst [vmem:[#allocation2 + $0x18] sm:$0xff] %v88
  %99 = vst [vmem:[#allocation2 + $0x20] sm:$0xff] %v89
  %v100 = vld [vmem:[%s0 + $0x8] sm:$0xff]
  %v101 = vld [vmem:[%s0 + $0x10] sm:$0xff]
  %v102 = vld [vmem:[%s0 + $0x18] sm:$0xff]
  %v106 = vcombine.high %v100, %v100
  %v107 = vcombine.high %v101, %v101
  %v108 = vcombine.high %v102, %v102
  %v112 = vcombine.low %v100, %v100
  %v113 = vcombine.low %v101, %v101
  %v114 = vcombine.low %v102, %v102
  %115 = vrot.lane.b32.xlu0 %v112, 125
  %v116 = vpop.permute.xlu0 %115
  %117 = vrot.lane.b32.xlu0 %v100, 125
  %v118 = vpop.permute.xlu0 %117
  %119 = vrot.lane.b32.xlu0 %v113, 125
  %v120 = vpop.permute.xlu0 %119
  %121 = vrot.lane.b32.xlu0 %v101, 125
  %v122 = vpop.permute.xlu0 %121
  %123 = vrot.lane.b32.xlu0 %v114, 125
  %v124 = vpop.permute.xlu0 %123
  %125 = vrot.lane.b32.xlu0 %v102, 125
  %v126 = vpop.permute.xlu0 %125
  %vm127 = vcmask 1022976
  %v128 = vsel %vm127, %v116, %v118
  %v129 = vsel %vm127, %v118, %v120
  %v130 = vsel %vm127, %v120, %v122
  %v131 = vsel %vm127, %v122, %v124
  %v132 = vsel %vm127, %v124, %v126
  %v139 = vsel %vm59, %v100, %v128
  %v140 = vsel %vm59, %v106, %v129
  %v141 = vsel %vm59, %v101, %v130
  %v142 = vsel %vm59, %v107, %v131
  %v143 = vsel %vm59, %v102, %v132
  %v144 = vsel %vm59, %v108, %v126
  %151 = vrot.lane.b32.xlu0 %v139, 12
  %v152 = vpop.permute.xlu0 %151
  %153 = vrot.lane.b32.xlu0 %v140, 12
  %v154 = vpop.permute.xlu0 %153
  %155 = vrot.lane.b32.xlu0 %v141, 12
  %v156 = vpop.permute.xlu0 %155
  %157 = vrot.lane.b32.xlu0 %v142, 12
  %v158 = vpop.permute.xlu0 %157
  %159 = vrot.lane.b32.xlu0 %v143, 12
  %v160 = vpop.permute.xlu0 %159
  %161 = vrot.lane.b32.xlu0 %v144, 12
  %v162 = vpop.permute.xlu0 %161
  %vm163 = vcmask 97280
  %v164 = vsel %vm163, %v152, %v154
  %v165 = vsel %vm163, %v154, %v156
  %v166 = vsel %vm163, %v156, %v158
  %v167 = vsel %vm163, %v158, %v160
  %v168 = vsel %vm163, %v160, %v162
  %174 = vst [vmem:[#allocation2 + $0x50] sm:$0xff] %v164
  %175 = vst [vmem:[#allocation2 + $0x58] sm:$0xff] %v165
  %176 = vst [vmem:[#allocation2 + $0x60] sm:$0xff] %v166
  %177 = vst [vmem:[#allocation2 + $0x68] sm:$0xff] %v167
  %178 = vst [vmem:[#allocation2 + $0x70] sm:$0xff] %v168
  %v179 = vld [vmem:[%s0 + $0xc] sm:$0xff]
  %v180 = vld [vmem:[%s0 + $0x14] sm:$0xff]
  %v181 = vld [vmem:[%s0 + $0x1c] sm:$0xff]
  %v185 = vcombine.high %v179, %v179
  %v186 = vcombine.high %v180, %v180
  %v187 = vcombine.high %v181, %v181
  %v191 = vcombine.low %v179, %v179
  %v192 = vcombine.low %v180, %v180
  %v193 = vcombine.low %v181, %v181
  %194 = vrot.lane.b32.xlu0 %v191, 122
  %v195 = vpop.permute.xlu0 %194
  %196 = vrot.lane.b32.xlu0 %v179, 122
  %v197 = vpop.permute.xlu0 %196
  %198 = vrot.lane.b32.xlu0 %v192, 122
  %v199 = vpop.permute.xlu0 %198
  %200 = vrot.lane.b32.xlu0 %v180, 122
  %v201 = vpop.permute.xlu0 %200
  %202 = vrot.lane.b32.xlu0 %v193, 122
  %v203 = vpop.permute.xlu0 %202
  %204 = vrot.lane.b32.xlu0 %v181, 122
  %v205 = vpop.permute.xlu0 %204
  %vm206 = vcmask 998400
  %v207 = vsel %vm206, %v195, %v197
  %v208 = vsel %vm206, %v197, %v199
  %v209 = vsel %vm206, %v199, %v201
  %v210 = vsel %vm206, %v201, %v203
  %v211 = vsel %vm206, %v203, %v205
  %v218 = vsel %vm59, %v179, %v207
  %v219 = vsel %vm59, %v185, %v208
  %v220 = vsel %vm59, %v180, %v209
  %v221 = vsel %vm59, %v186, %v210
  %v222 = vsel %vm59, %v181, %v211
  %v223 = vsel %vm59, %v187, %v205
  %230 = vrot.lane.b32.xlu0 %v218, 23
  %v231 = vpop.permute.xlu0 %230
  %232 = vrot.lane.b32.xlu0 %v219, 23
  %v233 = vpop.permute.xlu0 %232
  %234 = vrot.lane.b32.xlu0 %v220, 23
  %v235 = vpop.permute.xlu0 %234
  %236 = vrot.lane.b32.xlu0 %v221, 23
  %v237 = vpop.permute.xlu0 %236
  %238 = vrot.lane.b32.xlu0 %v222, 23
  %v239 = vpop.permute.xlu0 %238
  %240 = vrot.lane.b32.xlu0 %v223, 23
  %v241 = vpop.permute.xlu0 %240
  %vm242 = vcmask 187392
  %v243 = vsel %vm242, %v231, %v233
  %v244 = vsel %vm242, %v233, %v235
  %v245 = vsel %vm242, %v235, %v237
  %v246 = vsel %vm242, %v237, %v239
  %v247 = vsel %vm242, %v239, %v241
  %253 = vst [vmem:[#allocation2 + $0xa0] sm:$0xff] %v243
  %254 = vst [vmem:[#allocation2 + $0xa8] sm:$0xff] %v244
  %255 = vst [vmem:[#allocation2 + $0xb0] sm:$0xff] %v245
  %256 = vst [vmem:[#allocation2 + $0xb8] sm:$0xff] %v246
  %257 = vst [vmem:[#allocation2 + $0xc0] sm:$0xff] %v247
  %v258 = vld [vmem:[%s0 + $0x10] sm:$0xff]
  %v259 = vld [vmem:[%s0 + $0x18] sm:$0xff]
  %v260 = vld [vmem:[%s0 + $0x20] sm:$0xff]
  %v264 = vcombine.high %v258, %v258
  %v265 = vcombine.high %v259, %v259
  %v266 = vcombine.high %v260, %v260
  %v270 = vcombine.low %v258, %v258
  %v271 = vcombine.low %v259, %v259
  %v272 = vcombine.low %v260, %v260
  %273 = vrot.lane.b32.xlu0 %v270, 125
  %v274 = vpop.permute.xlu0 %273
  %275 = vrot.lane.b32.xlu0 %v258, 125
  %v276 = vpop.permute.xlu0 %275
  %277 = vrot.lane.b32.xlu0 %v271, 125
  %v278 = vpop.permute.xlu0 %277
  %279 = vrot.lane.b32.xlu0 %v259, 125
  %v280 = vpop.permute.xlu0 %279
  %281 = vrot.lane.b32.xlu0 %v272, 125
  %v282 = vpop.permute.xlu0 %281
  %283 = vrot.lane.b32.xlu0 %v260, 125
  %v284 = vpop.permute.xlu0 %283
  %v285 = vsel %vm127, %v274, %v276
  %v286 = vsel %vm127, %v276, %v278
  %v287 = vsel %vm127, %v278, %v280
  %v288 = vsel %vm127, %v280, %v282
  %v289 = vsel %vm127, %v282, %v284
  %v296 = vsel %vm59, %v258, %v285
  %v297 = vsel %vm59, %v264, %v286
  %v298 = vsel %vm59, %v259, %v287
  %v299 = vsel %vm59, %v265, %v288
  %v300 = vsel %vm59, %v260, %v289
  %v301 = vsel %vm59, %v266, %v284
  %308 = vrot.lane.b32.xlu0 %v296, 31
  %v309 = vpop.permute.xlu0 %308
  %310 = vrot.lane.b32.xlu0 %v297, 31
  %v311 = vpop.permute.xlu0 %310
  %312 = vrot.lane.b32.xlu0 %v298, 31
  %v313 = vpop.permute.xlu0 %312
  %314 = vrot.lane.b32.xlu0 %v299, 31
  %v315 = vpop.permute.xlu0 %314
  %316 = vrot.lane.b32.xlu0 %v300, 31
  %v317 = vpop.permute.xlu0 %316
  %318 = vrot.lane.b32.xlu0 %v301, 31
  %v319 = vpop.permute.xlu0 %318
  %vm320 = vcmask 252928
  %v321 = vsel %vm320, %v309, %v311
  %v322 = vsel %vm320, %v311, %v313
  %v323 = vsel %vm320, %v313, %v315
  %v324 = vsel %vm320, %v315, %v317
  %v325 = vsel %vm320, %v317, %v319
  %331 = vst [vmem:[#allocation2 + $0xf0] sm:$0xff] %v321
  %332 = vst [vmem:[#allocation2 + $0xf8] sm:$0xff] %v322
  %333 = vst [vmem:[#allocation2 + $0x100] sm:$0xff] %v323
  %334 = vst [vmem:[#allocation2 + $0x108] sm:$0xff] %v324
  %335 = vst [vmem:[#allocation2 + $0x110] sm:$0xff] %v325
  %v336 = vld [vmem:[%s0 + $0x10] sm:$0xff]
  %v337 = vld [vmem:[%s0 + $0x18] sm:$0xff]
  %v338 = vld [vmem:[%s0 + $0x20] sm:$0xff]
  %v339 = vld [vmem:[%s0 + $0x4] sm:$0xff]
  %v340 = vld [vmem:[%s0 + $0xc] sm:$0xff]
  %v341 = vld [vmem:[%s0 + $0x14] sm:$0xff]
  %v345 = vcombine.high %v336, %v336
  %v346 = vcombine.high %v337, %v337
  %v347 = vcombine.high %v338, %v338
  %v354 = vcombine.low %v339, %v339
  %v355 = vcombine.low %v340, %v340
  %v356 = vcombine.low %v341, %v341
  %357 = vrot.lane.b32.xlu0 %v354, 113
  %v358 = vpop.permute.xlu0 %357
  %359 = vrot.lane.b32.xlu0 %v339, 113
  %v360 = vpop.permute.xlu0 %359
  %361 = vrot.lane.b32.xlu0 %v355, 113
  %v362 = vpop.permute.xlu0 %361
  %363 = vrot.lane.b32.xlu0 %v340, 113
  %v364 = vpop.permute.xlu0 %363
  %365 = vrot.lane.b32.xlu0 %v356, 113
  %v366 = vpop.permute.xlu0 %365
  %367 = vrot.lane.b32.xlu0 %v341, 113
  %v368 = vpop.permute.xlu0 %367
  %vm369 = vcmask 924672
  %v370 = vsel %vm369, %v358, %v360
  %v371 = vsel %vm369, %v360, %v362
  %v372 = vsel %vm369, %v362, %v364
  %v373 = vsel %vm369, %v364, %v366
  %v374 = vsel %vm369, %v366, %v368
  %v381 = vsel %vm59, %v336, %v370
  %v382 = vsel %vm59, %v345, %v371
  %v383 = vsel %vm59, %v337, %v372
  %v384 = vsel %vm59, %v346, %v373
  %v385 = vsel %vm59, %v338, %v374
  %v386 = vsel %vm59, %v347, %v368
  %393 = vrot.lane.b32.xlu0 %v381, 25
  %v394 = vpop.permute.xlu0 %393
  %395 = vrot.lane.b32.xlu0 %v382, 25
  %v396 = vpop.permute.xlu0 %395
  %397 = vrot.lane.b32.xlu0 %v383, 25
  %v398 = vpop.permute.xlu0 %397
  %399 = vrot.lane.b32.xlu0 %v384, 25
  %v400 = vpop.permute.xlu0 %399
  %401 = vrot.lane.b32.xlu0 %v385, 25
  %v402 = vpop.permute.xlu0 %401
  %403 = vrot.lane.b32.xlu0 %v386, 25
  %v404 = vpop.permute.xlu0 %403
  %vm405 = vcmask 203776
  %v406 = vsel %vm405, %v394, %v396
  %v407 = vsel %vm405, %v396, %v398
  %v408 = vsel %vm405, %v398, %v400
  %v409 = vsel %vm405, %v400, %v402
  %v410 = vsel %vm405, %v402, %v404
  %416 = vst [vmem:[#allocation2 + $0x140] sm:$0xff] %v406
  %417 = vst [vmem:[#allocation2 + $0x148] sm:$0xff] %v407
  %418 = vst [vmem:[#allocation2 + $0x150] sm:$0xff] %v408
  %419 = vst [vmem:[#allocation2 + $0x158] sm:$0xff] %v409
  %420 = vst [vmem:[#allocation2 + $0x160] sm:$0xff] %v410
  %v421 = vld [vmem:[%s0 + $0x4] sm:$0xff]
  %v422 = vld [vmem:[%s0 + $0xc] sm:$0xff]
  %v423 = vld [vmem:[%s0 + $0x14] sm:$0xff]
  %v424 = vld [vmem:[%s0 + $0x8] sm:$0xff]
  %v425 = vld [vmem:[%s0 + $0x10] sm:$0xff]
  %v426 = vld [vmem:[%s0 + $0x18] sm:$0xff]
  %v430 = vcombine.high %v421, %v421
  %v431 = vcombine.high %v422, %v422
  %v432 = vcombine.high %v423, %v423
  %v439 = vcombine.low %v424, %v424
  %v440 = vcombine.low %v425, %v425
  %v441 = vcombine.low %v426, %v426
  %442 = vrot.lane.b32.xlu0 %v439, 122
  %v443 = vpop.permute.xlu0 %442
  %444 = vrot.lane.b32.xlu0 %v424, 122
  %v445 = vpop.permute.xlu0 %444
  %446 = vrot.lane.b32.xlu0 %v440, 122
  %v447 = vpop.permute.xlu0 %446
  %448 = vrot.lane.b32.xlu0 %v425, 122
  %v449 = vpop.permute.xlu0 %448
  %450 = vrot.lane.b32.xlu0 %v441, 122
  %v451 = vpop.permute.xlu0 %450
  %452 = vrot.lane.b32.xlu0 %v426, 122
  %v453 = vpop.permute.xlu0 %452
  %v454 = vsel %vm206, %v443, %v445
  %v455 = vsel %vm206, %v445, %v447
  %v456 = vsel %vm206, %v447, %v449
  %v457 = vsel %vm206, %v449, %v451
  %v458 = vsel %vm206, %v451, %v453
  %v465 = vsel %vm59, %v421, %v443
  %v466 = vsel %vm59, %v430, %v454
  %v467 = vsel %vm59, %v422, %v455
  %v468 = vsel %vm59, %v431, %v456
  %v469 = vsel %vm59, %v423, %v457
  %v470 = vsel %vm59, %v432, %v458
  %477 = vrot.lane.b32.xlu0 %v465, 4
  %v478 = vpop.permute.xlu0 %477
  %479 = vrot.lane.b32.xlu0 %v466, 4
  %v480 = vpop.permute.xlu0 %479
  %481 = vrot.lane.b32.xlu0 %v467, 4
  %v482 = vpop.permute.xlu0 %481
  %483 = vrot.lane.b32.xlu0 %v468, 4
  %v484 = vpop.permute.xlu0 %483
  %485 = vrot.lane.b32.xlu0 %v469, 4
  %v486 = vpop.permute.xlu0 %485
  %487 = vrot.lane.b32.xlu0 %v470, 4
  %v488 = vpop.permute.xlu0 %487
  %vm489 = vcmask 31744
  %v490 = vsel %vm489, %v478, %v480
  %v491 = vsel %vm489, %v480, %v482
  %v492 = vsel %vm489, %v482, %v484
  %v493 = vsel %vm489, %v484, %v486
  %v494 = vsel %vm489, %v486, %v488
  %500 = vst [vmem:[#allocation2 + $0x190] sm:$0xff] %v490
  %501 = vst [vmem:[#allocation2 + $0x198] sm:$0xff] %v491
  %502 = vst [vmem:[#allocation2 + $0x1a0] sm:$0xff] %v492
  %503 = vst [vmem:[#allocation2 + $0x1a8] sm:$0xff] %v493
  %504 = vst [vmem:[#allocation2 + $0x1b0] sm:$0xff] %v494
  %v505 = vld [vmem:[%s0 + $0xc] sm:$0xff]
  %v506 = vld [vmem:[%s0 + $0x14] sm:$0xff]
  %v507 = vld [vmem:[%s0 + $0x1c] sm:$0xff]
  %v511 = vcombine.high %v505, %v505
  %v512 = vcombine.high %v506, %v506
  %v513 = vcombine.high %v507, %v507
  %v517 = vcombine.low %v505, %v505
  %v518 = vcombine.low %v506, %v506
  %v519 = vcombine.low %v507, %v507
  %520 = vrot.lane.b32.xlu0 %v517, 116
  %v521 = vpop.permute.xlu0 %520
  %522 = vrot.lane.b32.xlu0 %v505, 116
  %v523 = vpop.permute.xlu0 %522
  %524 = vrot.lane.b32.xlu0 %v518, 116
  %v525 = vpop.permute.xlu0 %524
  %526 = vrot.lane.b32.xlu0 %v506, 116
  %v527 = vpop.permute.xlu0 %526
  %528 = vrot.lane.b32.xlu0 %v519, 116
  %v529 = vpop.permute.xlu0 %528
  %530 = vrot.lane.b32.xlu0 %v507, 116
  %v531 = vpop.permute.xlu0 %530
  %vm532 = vcmask 949248
  %v533 = vsel %vm532, %v521, %v523
  %v534 = vsel %vm532, %v523, %v525
  %v535 = vsel %vm532, %v525, %v527
  %v536 = vsel %vm532, %v527, %v529
  %v537 = vsel %vm532, %v529, %v531
  %v544 = vsel %vm59, %v505, %v533
  %v545 = vsel %vm59, %v511, %v534
  %v546 = vsel %vm59, %v506, %v535
  %v547 = vsel %vm59, %v512, %v536
  %v548 = vsel %vm59, %v507, %v537
  %v549 = vsel %vm59, %v513, %v531
  %556 = vrot.lane.b32.xlu0 %v544, 26
  %v557 = vpop.permute.xlu0 %556
  %558 = vrot.lane.b32.xlu0 %v545, 26
  %v559 = vpop.permute.xlu0 %558
  %560 = vrot.lane.b32.xlu0 %v546, 26
  %v561 = vpop.permute.xlu0 %560
  %562 = vrot.lane.b32.xlu0 %v547, 26
  %v563 = vpop.permute.xlu0 %562
  %564 = vrot.lane.b32.xlu0 %v548, 26
  %v565 = vpop.permute.xlu0 %564
  %566 = vrot.lane.b32.xlu0 %v549, 26
  %v567 = vpop.permute.xlu0 %566
  %vm568 = vcmask 211968
  %v569 = vsel %vm568, %v557, %v559
  %v570 = vsel %vm568, %v559, %v561
  %v571 = vsel %vm568, %v561, %v563
  %v572 = vsel %vm568, %v563, %v565
  %v573 = vsel %vm568, %v565, %v567
  %579 = vst [vmem:[#allocation2 + $0x1e0] sm:$0xff] %v569
  %580 = vst [vmem:[#allocation2 + $0x1e8] sm:$0xff] %v570
  %581 = vst [vmem:[#allocation2 + $0x1f0] sm:$0xff] %v571
  %582 = vst [vmem:[#allocation2 + $0x1f8] sm:$0xff] %v572
  %583 = vst [vmem:[#allocation2 + $0x200] sm:$0xff] %v573
  %v584 = vld [vmem:[%s0 + $0x14] sm:$0xff]
  %v585 = vld [vmem:[%s0 + $0x1c] sm:$0xff]
  %v586 = vld [vmem:[%s0 + $0x24] sm:$0xff]
  %v590 = vcombine.high %v584, %v584
  %v591 = vcombine.high %v585, %v585
  %v592 = vcombine.high %v586, %v586
  %v596 = vcombine.low %v584, %v584
  %v597 = vcombine.low %v585, %v585
  %v598 = vcombine.low %v586, %v586
  %599 = vrot.lane.b32.xlu0 %v596, 122
  %v600 = vpop.permute.xlu0 %599
  %601 = vrot.lane.b32.xlu0 %v584, 122
  %v602 = vpop.permute.xlu0 %601
  %603 = vrot.lane.b32.xlu0 %v597, 122
  %v604 = vpop.permute.xlu0 %603
  %605 = vrot.lane.b32.xlu0 %v585, 122
  %v606 = vpop.permute.xlu0 %605
  %607 = vrot.lane.b32.xlu0 %v598, 122
  %v608 = vpop.permute.xlu0 %607
  %609 = vrot.lane.b32.xlu0 %v586, 122
  %v610 = vpop.permute.xlu0 %609
  %v611 = vsel %vm206, %v600, %v602
  %v612 = vsel %vm206, %v602, %v604
  %v613 = vsel %vm206, %v604, %v606
  %v614 = vsel %vm206, %v606, %v608
  %v615 = vsel %vm206, %v608, %v610
  %v622 = vsel %vm59, %v584, %v611
  %v623 = vsel %vm59, %v590, %v612
  %v624 = vsel %vm59, %v585, %v613
  %v625 = vsel %vm59, %v591, %v614
  %v626 = vsel %vm59, %v586, %v615
  %v627 = vsel %vm59, %v592, %v610
  %634 = vrot.lane.b32.xlu0 %v622, 42
  %v635 = vpop.permute.xlu0 %634
  %636 = vrot.lane.b32.xlu0 %v623, 42
  %v637 = vpop.permute.xlu0 %636
  %638 = vrot.lane.b32.xlu0 %v624, 42
  %v639 = vpop.permute.xlu0 %638
  %640 = vrot.lane.b32.xlu0 %v625, 42
  %v641 = vpop.permute.xlu0 %640
  %642 = vrot.lane.b32.xlu0 %v626, 42
  %v643 = vpop.permute.xlu0 %642
  %644 = vrot.lane.b32.xlu0 %v627, 42
  %v645 = vpop.permute.xlu0 %644
  %vm646 = vcmask 343040
  %v647 = vsel %vm646, %v635, %v637
  %v648 = vsel %vm646, %v637, %v639
  %v649 = vsel %vm646, %v639, %v641
  %v650 = vsel %vm646, %v641, %v643
  %v651 = vsel %vm646, %v643, %v645
  %657 = vst [vmem:[#allocation2 + $0x230] sm:$0xff] %v647
  %658 = vst [vmem:[#allocation2 + $0x238] sm:$0xff] %v648
  %659 = vst [vmem:[#allocation2 + $0x240] sm:$0xff] %v649
  %660 = vst [vmem:[#allocation2 + $0x248] sm:$0xff] %v650
  %661 = vst [vmem:[#allocation2 + $0x250] sm:$0xff] %v651
  %v662 = vld [vmem:[%s0 + $0x14] sm:$0xff]
  %v663 = vld [vmem:[%s0 + $0x1c] sm:$0xff]
  %v664 = vld [vmem:[%s0 + $0x24] sm:$0xff]
  %v665 = vld [vmem:[%s0] sm:$0xff]
  %v666 = vld [vmem:[%s0 + $0x8] sm:$0xff]
  %v667 = vld [vmem:[%s0 + $0x10] sm:$0xf]
  %v671 = vcombine.high %v662, %v662
  %v672 = vcombine.high %v663, %v663
  %v673 = vcombine.high %v664, %v664
  %v680 = vcombine.low %v665, %v665
  %v681 = vcombine.low %v666, %v666
  %v682 = vcombine.low %v667, %v667
  %683 = vrot.lane.b32.xlu0 %v680, 98
  %v684 = vpop.permute.xlu0 %683
  %685 = vrot.lane.b32.xlu0 %v665, 98
  %v686 = vpop.permute.xlu0 %685
  %687 = vrot.lane.b32.xlu0 %v681, 98
  %v688 = vpop.permute.xlu0 %687
  %689 = vrot.lane.b32.xlu0 %v666, 98
  %v690 = vpop.permute.xlu0 %689
  %691 = vrot.lane.b32.xlu0 %v682, 98
  %v692 = vpop.permute.xlu0 %691
  %vm693 = vcmask 801792
  %v694 = vsel %vm693, %v684, %v686
  %v695 = vsel %vm693, %v686, %v688
  %v696 = vsel %vm693, %v688, %v690
  %v697 = vsel %vm693, %v690, %v692
  %v704 = vsel %vm59, %v662, %v684
  %v705 = vsel %vm59, %v671, %v694
  %v706 = vsel %vm59, %v663, %v695
  %v707 = vsel %vm59, %v672, %v696
  %v708 = vsel %vm59, %v664, %v697
  %v709 = vsel %vm59, %v673, %v692
  %716 = vrot.lane.b32.xlu0 %v704, 30
  %v717 = vpop.permute.xlu0 %716
  %718 = vrot.lane.b32.xlu0 %v705, 30
  %v719 = vpop.permute.xlu0 %718
  %720 = vrot.lane.b32.xlu0 %v706, 30
  %v721 = vpop.permute.xlu0 %720
  %722 = vrot.lane.b32.xlu0 %v707, 30
  %v723 = vpop.permute.xlu0 %722
  %724 = vrot.lane.b32.xlu0 %v708, 30
  %v725 = vpop.permute.xlu0 %724
  %726 = vrot.lane.b32.xlu0 %v709, 30
  %v727 = vpop.permute.xlu0 %726
  %vm728 = vcmask 244736
  %v729 = vsel %vm728, %v717, %v719
  %v730 = vsel %vm728, %v719, %v721
  %v731 = vsel %vm728, %v721, %v723
  %v732 = vsel %vm728, %v723, %v725
  %v733 = vsel %vm728, %v725, %v727
  %739 = vst [vmem:[#allocation2 + $0x280] sm:$0xff] %v729
  %740 = vst [vmem:[#allocation2 + $0x288] sm:$0xff] %v730
  %741 = vst [vmem:[#allocation2 + $0x290] sm:$0xff] %v731
  %742 = vst [vmem:[#allocation2 + $0x298] sm:$0xff] %v732
  %743 = vst [vmem:[#allocation2 + $0x2a0] sm:$0xff] %v733
  %v744 = vld [vmem:[%s0] sm:$0xff]
  %v745 = vld [vmem:[%s0 + $0x8] sm:$0xff]
  %v746 = vld [vmem:[%s0 + $0x10] sm:$0xff]
  %v750 = vcombine.high %v744, %v744
  %v751 = vcombine.high %v745, %v745
  %v752 = vcombine.high %v746, %v746
  %v756 = vcombine.low %v744, %v744
  %v757 = vcombine.low %v745, %v745
  %v758 = vcombine.low %v746, %v746
  %759 = vrot.lane.b32.xlu0 %v756, 116
  %v760 = vpop.permute.xlu0 %759
  %761 = vrot.lane.b32.xlu0 %v744, 116
  %v762 = vpop.permute.xlu0 %761
  %763 = vrot.lane.b32.xlu0 %v757, 116
  %v764 = vpop.permute.xlu0 %763
  %765 = vrot.lane.b32.xlu0 %v745, 116
  %v766 = vpop.permute.xlu0 %765
  %767 = vrot.lane.b32.xlu0 %v758, 116
  %v768 = vpop.permute.xlu0 %767
  %769 = vrot.lane.b32.xlu0 %v746, 116
  %v770 = vpop.permute.xlu0 %769
  %v771 = vsel %vm532, %v760, %v762
  %v772 = vsel %vm532, %v762, %v764
  %v773 = vsel %vm532, %v764, %v766
  %v774 = vsel %vm532, %v766, %v768
  %v775 = vsel %vm532, %v768, %v770
  %v782 = vsel %vm59, %v744, %v771
  %v783 = vsel %vm59, %v750, %v772
  %v784 = vsel %vm59, %v745, %v773
  %v785 = vsel %vm59, %v751, %v774
  %v786 = vsel %vm59, %v746, %v775
  %v787 = vsel %vm59, %v752, %v770
  %794 = vrot.lane.b32.xlu0 %v782, 116
  %v795 = vpop.permute.xlu0 %794
  %796 = vrot.lane.b32.xlu0 %v783, 116
  %v797 = vpop.permute.xlu0 %796
  %798 = vrot.lane.b32.xlu0 %v784, 116
  %v799 = vpop.permute.xlu0 %798
  %800 = vrot.lane.b32.xlu0 %v785, 116
  %v801 = vpop.permute.xlu0 %800
  %802 = vrot.lane.b32.xlu0 %v786, 116
  %v803 = vpop.permute.xlu0 %802
  %804 = vrot.lane.b32.xlu0 %v787, 116
  %v805 = vpop.permute.xlu0 %804
  %v806 = vsel %vm532, %v795, %v797
  %v807 = vsel %vm532, %v797, %v799
  %v808 = vsel %vm532, %v799, %v801
  %v809 = vsel %vm532, %v801, %v803
  %v810 = vsel %vm532, %v803, %v805
  %816 = vst [vmem:[#allocation2 + $0x2d0] sm:$0xff] %v806
  %817 = vst [vmem:[#allocation2 + $0x2d8] sm:$0xff] %v807
  %818 = vst [vmem:[#allocation2 + $0x2e0] sm:$0xff] %v808
  %819 = vst [vmem:[#allocation2 + $0x2e8] sm:$0xff] %v809
  %820 = vst [vmem:[#allocation2 + $0x2f0] sm:$0xff] %v810
  %v821 = vld [vmem:[%s0 + $0xc] sm:$0xff]
  %v822 = vld [vmem:[%s0 + $0x14] sm:$0xff]
  %v823 = vld [vmem:[%s0 + $0x1c] sm:$0xff]
  %v827 = vcombine.high %v821, %v821
  %v828 = vcombine.high %v822, %v822
  %v829 = vcombine.high %v823, %v823
  %v833 = vcombine.low %v821, %v821
  %v834 = vcombine.low %v822, %v822
  %v835 = vcombine.low %v823, %v823
  %836 = vrot.lane.b32.xlu0 %v833, 104
  %v837 = vpop.permute.xlu0 %836
  %838 = vrot.lane.b32.xlu0 %v821, 104
  %v839 = vpop.permute.xlu0 %838
  %840 = vrot.lane.b32.xlu0 %v834, 104
  %v841 = vpop.permute.xlu0 %840
  %842 = vrot.lane.b32.xlu0 %v822, 104
  %v843 = vpop.permute.xlu0 %842
  %844 = vrot.lane.b32.xlu0 %v835, 104
  %v845 = vpop.permute.xlu0 %844
  %846 = vrot.lane.b32.xlu0 %v823, 104
  %v847 = vpop.permute.xlu0 %846
  %vm848 = vcmask 850944
  %v849 = vsel %vm848, %v837, %v839
  %v850 = vsel %vm848, %v839, %v841
  %v851 = vsel %vm848, %v841, %v843
  %v852 = vsel %vm848, %v843, %v845
  %v853 = vsel %vm848, %v845, %v847
  %v860 = vsel %vm59, %v821, %v849
  %v861 = vsel %vm59, %v827, %v850
  %v862 = vsel %vm59, %v822, %v851
  %v863 = vsel %vm59, %v828, %v852
  %v864 = vsel %vm59, %v823, %v853
  %v865 = vsel %vm59, %v829, %v847
  %872 = vrot.lane.b32.xlu0 %v860, 32
  %v873 = vpop.permute.xlu0 %872
  %874 = vrot.lane.b32.xlu0 %v861, 32
  %v875 = vpop.permute.xlu0 %874
  %876 = vrot.lane.b32.xlu0 %v862, 32
  %v877 = vpop.permute.xlu0 %876
  %878 = vrot.lane.b32.xlu0 %v863, 32
  %v879 = vpop.permute.xlu0 %878
  %880 = vrot.lane.b32.xlu0 %v864, 32
  %v881 = vpop.permute.xlu0 %880
  %882 = vrot.lane.b32.xlu0 %v865, 32
  %v883 = vpop.permute.xlu0 %882
  %vm884 = vcmask 261120
  %v885 = vsel %vm884, %v873, %v875
  %v886 = vsel %vm884, %v875, %v877
  %v887 = vsel %vm884, %v877, %v879
  %v888 = vsel %vm884, %v879, %v881
  %v889 = vsel %vm884, %v881, %v883
  %895 = vst [vmem:[#allocation2 + $0x320] sm:$0xff] %v885
  %896 = vst [vmem:[#allocation2 + $0x328] sm:$0xff] %v886
  %897 = vst [vmem:[#allocation2 + $0x330] sm:$0xff] %v887
  %898 = vst [vmem:[#allocation2 + $0x338] sm:$0xff] %v888
  %899 = vst [vmem:[#allocation2 + $0x340] sm:$0xff] %v889
  %v900 = vld [vmem:[%s0 + $0x1c] sm:$0xff]
  %v901 = vld [vmem:[%s0 + $0x24] sm:$0xff]
  %v902 = vld [vmem:[%s0 + $0x2c] sm:$0xff]
  %v906 = vcombine.high %v900, %v900
  %v907 = vcombine.high %v901, %v901
  %v908 = vcombine.high %v902, %v902
  %v912 = vcombine.low %v900, %v900
  %v913 = vcombine.low %v901, %v901
  %v914 = vcombine.low %v902, %v902
  %915 = vrot.lane.b32.xlu0 %v912, 116
  %v916 = vpop.permute.xlu0 %915
  %917 = vrot.lane.b32.xlu0 %v900, 116
  %v918 = vpop.permute.xlu0 %917
  %919 = vrot.lane.b32.xlu0 %v913, 116
  %v920 = vpop.permute.xlu0 %919
  %921 = vrot.lane.b32.xlu0 %v901, 116
  %v922 = vpop.permute.xlu0 %921
  %923 = vrot.lane.b32.xlu0 %v914, 116
  %v924 = vpop.permute.xlu0 %923
  %925 = vrot.lane.b32.xlu0 %v902, 116
  %v926 = vpop.permute.xlu0 %925
  %v927 = vsel %vm532, %v916, %v918
  %v928 = vsel %vm532, %v918, %v920
  %v929 = vsel %vm532, %v920, %v922
  %v930 = vsel %vm532, %v922, %v924
  %v931 = vsel %vm532, %v924, %v926
  %v938 = vsel %vm59, %v900, %v927
  %v939 = vsel %vm59, %v906, %v928
  %v940 = vsel %vm59, %v901, %v929
  %v941 = vsel %vm59, %v907, %v930
  %v942 = vsel %vm59, %v902, %v931
  %v943 = vsel %vm59, %v908, %v926
  %950 = vrot.lane.b32.xlu0 %v938, 64
  %v951 = vpop.permute.xlu0 %950
  %952 = vrot.lane.b32.xlu0 %v939, 64
  %v953 = vpop.permute.xlu0 %952
  %954 = vrot.lane.b32.xlu0 %v940, 64
  %v955 = vpop.permute.xlu0 %954
  %956 = vrot.lane.b32.xlu0 %v941, 64
  %v957 = vpop.permute.xlu0 %956
  %958 = vrot.lane.b32.xlu0 %v942, 64
  %v959 = vpop.permute.xlu0 %958
  %960 = vrot.lane.b32.xlu0 %v943, 64
  %v961 = vpop.permute.xlu0 %960
  %vm962 = vcmask 523264
  %v963 = vsel %vm962, %v951, %v953
  %v964 = vsel %vm962, %v953, %v955
  %v965 = vsel %vm962, %v955, %v957
  %v966 = vsel %vm962, %v957, %v959
  %v967 = vsel %vm962, %v959, %v961
  %973 = vst [vmem:[#allocation2 + $0x370] sm:$0xff] %v963
  %974 = vst [vmem:[#allocation2 + $0x378] sm:$0xff] %v964
  %975 = vst [vmem:[#allocation2 + $0x380] sm:$0xff] %v965
  %976 = vst [vmem:[#allocation2 + $0x388] sm:$0xff] %v966
  %977 = vst [vmem:[#allocation2 + $0x390] sm:$0xff] %v967
  %v978 = vld [vmem:[%s0 + $0x1c] sm:$0xff]
  %v979 = vld [vmem:[%s0 + $0x24] sm:$0xff]
  %v980 = vld [vmem:[%s0 + $0x2c] sm:$0xff]
  %v984 = vcombine.high %v978, %v978
  %v985 = vcombine.high %v979, %v979
  %v986 = vcombine.high %v980, %v980
  %987 = vrot.lane.b32.xlu0 %v978, 40
  %v988 = vpop.permute.xlu0 %987
  %989 = vrot.lane.b32.xlu0 %v984, 40
  %v990 = vpop.permute.xlu0 %989
  %991 = vrot.lane.b32.xlu0 %v979, 40
  %v992 = vpop.permute.xlu0 %991
  %993 = vrot.lane.b32.xlu0 %v985, 40
  %v994 = vpop.permute.xlu0 %993
  %995 = vrot.lane.b32.xlu0 %v980, 40
  %v996 = vpop.permute.xlu0 %995
  %997 = vrot.lane.b32.xlu0 %v986, 40
  %v998 = vpop.permute.xlu0 %997
  %vm999 = vcmask 326656
  %v1000 = vsel %vm999, %v988, %v990
  %v1001 = vsel %vm999, %v990, %v992
  %v1002 = vsel %vm999, %v992, %v994
  %v1003 = vsel %vm999, %v994, %v996
  %v1004 = vsel %vm999, %v996, %v998
  %1010 = vst [vmem:[#allocation2 + $0x3c0] sm:$0xf] %v1000
  %1011 = vst [vmem:[#allocation2 + $0x3c8] sm:$0xf] %v1001
  %1012 = vst [vmem:[#allocation2 + $0x3d0] sm:$0xf] %v1002
  %1013 = vst [vmem:[#allocation2 + $0x3d8] sm:$0xf] %v1003
  %1014 = vst [vmem:[#allocation2 + $0x3e0] sm:$0xf] %v1004
  %s1015 = scalar_lea.vmem %s0, 52
  %v1016 = vld [vmem:[%s1015 + $0xc] sm:$0xff]
  %v1017 = vld [vmem:[%s1015 + $0x14] sm:$0xff]
  %v1018 = vld [vmem:[%s1015 + $0x1c] sm:$0xff]
  %v1019 = vld [vmem:[%s1015 + $0x8] sm:$0xff]
  %v1020 = vld [vmem:[%s1015 + $0x10] sm:$0xff]
  %v1021 = vld [vmem:[%s1015 + $0x18] sm:$0xff]
  %v1025 = vcombine.high %v1016, %v1016
  %v1026 = vcombine.high %v1017, %v1017
  %v1027 = vcombine.high %v1018, %v1018
  %v1034 = vcombine.low %v1019, %v1019
  %v1035 = vcombine.low %v1020, %v1020
  %v1036 = vcombine.low %v1021, %v1021
  %1037 = vrot.lane.b32.xlu0 %v1034, 123
  %v1038 = vpop.permute.xlu0 %1037
  %1039 = vrot.lane.b32.xlu0 %v1019, 123
  %v1040 = vpop.permute.xlu0 %1039
  %1041 = vrot.lane.b32.xlu0 %v1035, 123
  %v1042 = vpop.permute.xlu0 %1041
  %1043 = vrot.lane.b32.xlu0 %v1020, 123
  %v1044 = vpop.permute.xlu0 %1043
  %1045 = vrot.lane.b32.xlu0 %v1036, 123
  %v1046 = vpop.permute.xlu0 %1045
  %1047 = vrot.lane.b32.xlu0 %v1021, 123
  %v1048 = vpop.permute.xlu0 %1047
  %v1049 = vsel %vm47, %v1038, %v1040
  %v1050 = vsel %vm47, %v1040, %v1042
  %v1051 = vsel %vm47, %v1042, %v1044
  %v1052 = vsel %vm47, %v1044, %v1046
  %v1053 = vsel %vm47, %v1046, %v1048
  %v1060 = vsel %vm59, %v1016, %v1049
  %v1061 = vsel %vm59, %v1025, %v1050
  %v1062 = vsel %vm59, %v1017, %v1051
  %v1063 = vsel %vm59, %v1026, %v1052
  %v1064 = vsel %vm59, %v1018, %v1053
  %v1065 = vsel %vm59, %v1027, %v1048
  %1072 = vrot.lane.b32.xlu0 %v1060, 20
  %v1073 = vpop.permute.xlu0 %1072
  %1074 = vrot.lane.b32.xlu0 %v1061, 20
  %v1075 = vpop.permute.xlu0 %1074
  %1076 = vrot.lane.b32.xlu0 %v1062, 20
  %v1077 = vpop.permute.xlu0 %1076
  %1078 = vrot.lane.b32.xlu0 %v1063, 20
  %v1079 = vpop.permute.xlu0 %1078
  %1080 = vrot.lane.b32.xlu0 %v1064, 20
  %v1081 = vpop.permute.xlu0 %1080
  %1082 = vrot.lane.b32.xlu0 %v1065, 20
  %v1083 = vpop.permute.xlu0 %1082
  %v1084 = vsel %vm84, %v1073, %v1075
  %v1085 = vsel %vm84, %v1075, %v1077
  %v1086 = vsel %vm84, %v1077, %v1079
  %v1087 = vsel %vm84, %v1079, %v1081
  %v1088 = vsel %vm84, %v1081, %v1083
  %1094 = vst [vmem:[#allocation2 + $0x28] sm:$0xff] %v1084
  %1095 = vst [vmem:[#allocation2 + $0x30] sm:$0xff] %v1085
  %1096 = vst [vmem:[#allocation2 + $0x38] sm:$0xff] %v1086
  %1097 = vst [vmem:[#allocation2 + $0x40] sm:$0xff] %v1087
  %1098 = vst [vmem:[#allocation2 + $0x48] sm:$0xff] %v1088
  %v1099 = vld [vmem:[%s1015 + $0x8] sm:$0xff]
  %v1100 = vld [vmem:[%s1015 + $0x10] sm:$0xff]
  %v1101 = vld [vmem:[%s1015 + $0x18] sm:$0xff]
  %v1105 = vcombine.high %v1099, %v1099
  %v1106 = vcombine.high %v1100, %v1100
  %v1107 = vcombine.high %v1101, %v1101
  %v1111 = vcombine.low %v1099, %v1099
  %v1112 = vcombine.low %v1100, %v1100
  %v1113 = vcombine.low %v1101, %v1101
  %1114 = vrot.lane.b32.xlu0 %v1111, 125
  %v1115 = vpop.permute.xlu0 %1114
  %1116 = vrot.lane.b32.xlu0 %v1099, 125
  %v1117 = vpop.permute.xlu0 %1116
  %1118 = vrot.lane.b32.xlu0 %v1112, 125
  %v1119 = vpop.permute.xlu0 %1118
  %1120 = vrot.lane.b32.xlu0 %v1100, 125
  %v1121 = vpop.permute.xlu0 %1120
  %1122 = vrot.lane.b32.xlu0 %v1113, 125
  %v1123 = vpop.permute.xlu0 %1122
  %1124 = vrot.lane.b32.xlu0 %v1101, 125
  %v1125 = vpop.permute.xlu0 %1124
  %v1126 = vsel %vm127, %v1115, %v1117
  %v1127 = vsel %vm127, %v1117, %v1119
  %v1128 = vsel %vm127, %v1119, %v1121
  %v1129 = vsel %vm127, %v1121, %v1123
  %v1130 = vsel %vm127, %v1123, %v1125
  %v1137 = vsel %vm59, %v1099, %v1126
  %v1138 = vsel %vm59, %v1105, %v1127
  %v1139 = vsel %vm59, %v1100, %v1128
  %v1140 = vsel %vm59, %v1106, %v1129
  %v1141 = vsel %vm59, %v1101, %v1130
  %v1142 = vsel %vm59, %v1107, %v1125
  %1149 = vrot.lane.b32.xlu0 %v1137, 12
  %v1150 = vpop.permute.xlu0 %1149
  %1151 = vrot.lane.b32.xlu0 %v1138, 12
  %v1152 = vpop.permute.xlu0 %1151
  %1153 = vrot.lane.b32.xlu0 %v1139, 12
  %v1154 = vpop.permute.xlu0 %1153
  %1155 = vrot.lane.b32.xlu0 %v1140, 12
  %v1156 = vpop.permute.xlu0 %1155
  %1157 = vrot.lane.b32.xlu0 %v1141, 12
  %v1158 = vpop.permute.xlu0 %1157
  %1159 = vrot.lane.b32.xlu0 %v1142, 12
  %v1160 = vpop.permute.xlu0 %1159
  %v1161 = vsel %vm163, %v1150, %v1152
  %v1162 = vsel %vm163, %v1152, %v1154
  %v1163 = vsel %vm163, %v1154, %v1156
  %v1164 = vsel %vm163, %v1156, %v1158
  %v1165 = vsel %vm163, %v1158, %v1160
  %1171 = vst [vmem:[#allocation2 + $0x78] sm:$0xff] %v1161
  %1172 = vst [vmem:[#allocation2 + $0x80] sm:$0xff] %v1162
  %1173 = vst [vmem:[#allocation2 + $0x88] sm:$0xff] %v1163
  %1174 = vst [vmem:[#allocation2 + $0x90] sm:$0xff] %v1164
  %1175 = vst [vmem:[#allocation2 + $0x98] sm:$0xff] %v1165
  %v1176 = vld [vmem:[%s1015 + $0xc] sm:$0xff]
  %v1177 = vld [vmem:[%s1015 + $0x14] sm:$0xff]
  %v1178 = vld [vmem:[%s1015 + $0x1c] sm:$0xff]
  %v1182 = vcombine.high %v1176, %v1176
  %v1183 = vcombine.high %v1177, %v1177
  %v1184 = vcombine.high %v1178, %v1178
  %v1188 = vcombine.low %v1176, %v1176
  %v1189 = vcombine.low %v1177, %v1177
  %v1190 = vcombine.low %v1178, %v1178
  %1191 = vrot.lane.b32.xlu0 %v1188, 122
  %v1192 = vpop.permute.xlu0 %1191
  %1193 = vrot.lane.b32.xlu0 %v1176, 122
  %v1194 = vpop.permute.xlu0 %1193
  %1195 = vrot.lane.b32.xlu0 %v1189, 122
  %v1196 = vpop.permute.xlu0 %1195
  %1197 = vrot.lane.b32.xlu0 %v1177, 122
  %v1198 = vpop.permute.xlu0 %1197
  %1199 = vrot.lane.b32.xlu0 %v1190, 122
  %v1200 = vpop.permute.xlu0 %1199
  %1201 = vrot.lane.b32.xlu0 %v1178, 122
  %v1202 = vpop.permute.xlu0 %1201
  %v1203 = vsel %vm206, %v1192, %v1194
  %v1204 = vsel %vm206, %v1194, %v1196
  %v1205 = vsel %vm206, %v1196, %v1198
  %v1206 = vsel %vm206, %v1198, %v1200
  %v1207 = vsel %vm206, %v1200, %v1202
  %v1214 = vsel %vm59, %v1176, %v1203
  %v1215 = vsel %vm59, %v1182, %v1204
  %v1216 = vsel %vm59, %v1177, %v1205
  %v1217 = vsel %vm59, %v1183, %v1206
  %v1218 = vsel %vm59, %v1178, %v1207
  %v1219 = vsel %vm59, %v1184, %v1202
  %1226 = vrot.lane.b32.xlu0 %v1214, 23
  %v1227 = vpop.permute.xlu0 %1226
  %1228 = vrot.lane.b32.xlu0 %v1215, 23
  %v1229 = vpop.permute.xlu0 %1228
  %1230 = vrot.lane.b32.xlu0 %v1216, 23
  %v1231 = vpop.permute.xlu0 %1230
  %1232 = vrot.lane.b32.xlu0 %v1217, 23
  %v1233 = vpop.permute.xlu0 %1232
  %1234 = vrot.lane.b32.xlu0 %v1218, 23
  %v1235 = vpop.permute.xlu0 %1234
  %1236 = vrot.lane.b32.xlu0 %v1219, 23
  %v1237 = vpop.permute.xlu0 %1236
  %v1238 = vsel %vm242, %v1227, %v1229
  %v1239 = vsel %vm242, %v1229, %v1231
  %v1240 = vsel %vm242, %v1231, %v1233
  %v1241 = vsel %vm242, %v1233, %v1235
  %v1242 = vsel %vm242, %v1235, %v1237
  %1248 = vst [vmem:[#allocation2 + $0xc8] sm:$0xff] %v1238
  %1249 = vst [vmem:[#allocation2 + $0xd0] sm:$0xff] %v1239
  %1250 = vst [vmem:[#allocation2 + $0xd8] sm:$0xff] %v1240
  %1251 = vst [vmem:[#allocation2 + $0xe0] sm:$0xff] %v1241
  %1252 = vst [vmem:[#allocation2 + $0xe8] sm:$0xff] %v1242
  %v1253 = vld [vmem:[%s1015 + $0x10] sm:$0xff]
  %v1254 = vld [vmem:[%s1015 + $0x18] sm:$0xff]
  %v1255 = vld [vmem:[%s1015 + $0x20] sm:$0xff]
  %v1259 = vcombine.high %v1253, %v1253
  %v1260 = vcombine.high %v1254, %v1254
  %v1261 = vcombine.high %v1255, %v1255
  %v1265 = vcombine.low %v1253, %v1253
  %v1266 = vcombine.low %v1254, %v1254
  %v1267 = vcombine.low %v1255, %v1255
  %1268 = vrot.lane.b32.xlu0 %v1265, 125
  %v1269 = vpop.permute.xlu0 %1268
  %1270 = vrot.lane.b32.xlu0 %v1253, 125
  %v1271 = vpop.permute.xlu0 %1270
  %1272 = vrot.lane.b32.xlu0 %v1266, 125
  %v1273 = vpop.permute.xlu0 %1272
  %1274 = vrot.lane.b32.xlu0 %v1254, 125
  %v1275 = vpop.permute.xlu0 %1274
  %1276 = vrot.lane.b32.xlu0 %v1267, 125
  %v1277 = vpop.permute.xlu0 %1276
  %1278 = vrot.lane.b32.xlu0 %v1255, 125
  %v1279 = vpop.permute.xlu0 %1278
  %v1280 = vsel %vm127, %v1269, %v1271
  %v1281 = vsel %vm127, %v1271, %v1273
  %v1282 = vsel %vm127, %v1273, %v1275
  %v1283 = vsel %vm127, %v1275, %v1277
  %v1284 = vsel %vm127, %v1277, %v1279
  %v1291 = vsel %vm59, %v1253, %v1280
  %v1292 = vsel %vm59, %v1259, %v1281
  %v1293 = vsel %vm59, %v1254, %v1282
  %v1294 = vsel %vm59, %v1260, %v1283
  %v1295 = vsel %vm59, %v1255, %v1284
  %v1296 = vsel %vm59, %v1261, %v1279
  %1303 = vrot.lane.b32.xlu0 %v1291, 31
  %v1304 = vpop.permute.xlu0 %1303
  %1305 = vrot.lane.b32.xlu0 %v1292, 31
  %v1306 = vpop.permute.xlu0 %1305
  %1307 = vrot.lane.b32.xlu0 %v1293, 31
  %v1308 = vpop.permute.xlu0 %1307
  %1309 = vrot.lane.b32.xlu0 %v1294, 31
  %v1310 = vpop.permute.xlu0 %1309
  %1311 = vrot.lane.b32.xlu0 %v1295, 31
  %v1312 = vpop.permute.xlu0 %1311
  %1313 = vrot.lane.b32.xlu0 %v1296, 31
  %v1314 = vpop.permute.xlu0 %1313
  %v1315 = vsel %vm320, %v1304, %v1306
  %v1316 = vsel %vm320, %v1306, %v1308
  %v1317 = vsel %vm320, %v1308, %v1310
  %v1318 = vsel %vm320, %v1310, %v1312
  %v1319 = vsel %vm320, %v1312, %v1314
  %1325 = vst [vmem:[#allocation2 + $0x118] sm:$0xff] %v1315
  %1326 = vst [vmem:[#allocation2 + $0x120] sm:$0xff] %v1316
  %1327 = vst [vmem:[#allocation2 + $0x128] sm:$0xff] %v1317
  %1328 = vst [vmem:[#allocation2 + $0x130] sm:$0xff] %v1318
  %1329 = vst [vmem:[#allocation2 + $0x138] sm:$0xff] %v1319
  %v1330 = vld [vmem:[%s1015 + $0x10] sm:$0xff]
  %v1331 = vld [vmem:[%s1015 + $0x18] sm:$0xff]
  %v1332 = vld [vmem:[%s1015 + $0x20] sm:$0xff]
  %v1333 = vld [vmem:[%s1015 + $0x4] sm:$0xff]
  %v1334 = vld [vmem:[%s1015 + $0xc] sm:$0xff]
  %v1335 = vld [vmem:[%s1015 + $0x14] sm:$0xff]
  %v1339 = vcombine.high %v1330, %v1330
  %v1340 = vcombine.high %v1331, %v1331
  %v1341 = vcombine.high %v1332, %v1332
  %v1348 = vcombine.low %v1333, %v1333
  %v1349 = vcombine.low %v1334, %v1334
  %v1350 = vcombine.low %v1335, %v1335
  %1351 = vrot.lane.b32.xlu0 %v1348, 113
  %v1352 = vpop.permute.xlu0 %1351
  %1353 = vrot.lane.b32.xlu0 %v1333, 113
  %v1354 = vpop.permute.xlu0 %1353
  %1355 = vrot.lane.b32.xlu0 %v1349, 113
  %v1356 = vpop.permute.xlu0 %1355
  %1357 = vrot.lane.b32.xlu0 %v1334, 113
  %v1358 = vpop.permute.xlu0 %1357
  %1359 = vrot.lane.b32.xlu0 %v1350, 113
  %v1360 = vpop.permute.xlu0 %1359
  %1361 = vrot.lane.b32.xlu0 %v1335, 113
  %v1362 = vpop.permute.xlu0 %1361
  %v1363 = vsel %vm369, %v1352, %v1354
  %v1364 = vsel %vm369, %v1354, %v1356
  %v1365 = vsel %vm369, %v1356, %v1358
  %v1366 = vsel %vm369, %v1358, %v1360
  %v1367 = vsel %vm369, %v1360, %v1362
  %v1374 = vsel %vm59, %v1330, %v1363
  %v1375 = vsel %vm59, %v1339, %v1364
  %v1376 = vsel %vm59, %v1331, %v1365
  %v1377 = vsel %vm59, %v1340, %v1366
  %v1378 = vsel %vm59, %v1332, %v1367
  %v1379 = vsel %vm59, %v1341, %v1362
  %1386 = vrot.lane.b32.xlu0 %v1374, 25
  %v1387 = vpop.permute.xlu0 %1386
  %1388 = vrot.lane.b32.xlu0 %v1375, 25
  %v1389 = vpop.permute.xlu0 %1388
  %1390 = vrot.lane.b32.xlu0 %v1376, 25
  %v1391 = vpop.permute.xlu0 %1390
  %1392 = vrot.lane.b32.xlu0 %v1377, 25
  %v1393 = vpop.permute.xlu0 %1392
  %1394 = vrot.lane.b32.xlu0 %v1378, 25
  %v1395 = vpop.permute.xlu0 %1394
  %1396 = vrot.lane.b32.xlu0 %v1379, 25
  %v1397 = vpop.permute.xlu0 %1396
  %v1398 = vsel %vm405, %v1387, %v1389
  %v1399 = vsel %vm405, %v1389, %v1391
  %v1400 = vsel %vm405, %v1391, %v1393
  %v1401 = vsel %vm405, %v1393, %v1395
  %v1402 = vsel %vm405, %v1395, %v1397
  %1408 = vst [vmem:[#allocation2 + $0x168] sm:$0xff] %v1398
  %1409 = vst [vmem:[#allocation2 + $0x170] sm:$0xff] %v1399
  %1410 = vst [vmem:[#allocation2 + $0x178] sm:$0xff] %v1400
  %1411 = vst [vmem:[#allocation2 + $0x180] sm:$0xff] %v1401
  %1412 = vst [vmem:[#allocation2 + $0x188] sm:$0xff] %v1402
  %v1413 = vld [vmem:[%s1015 + $0x4] sm:$0xff]
  %v1414 = vld [vmem:[%s1015 + $0xc] sm:$0xff]
  %v1415 = vld [vmem:[%s1015 + $0x14] sm:$0xff]
  %v1416 = vld [vmem:[%s1015 + $0x8] sm:$0xff]
  %v1417 = vld [vmem:[%s1015 + $0x10] sm:$0xff]
  %v1418 = vld [vmem:[%s1015 + $0x18] sm:$0xff]
  %v1422 = vcombine.high %v1413, %v1413
  %v1423 = vcombine.high %v1414, %v1414
  %v1424 = vcombine.high %v1415, %v1415
  %v1431 = vcombine.low %v1416, %v1416
  %v1432 = vcombine.low %v1417, %v1417
  %v1433 = vcombine.low %v1418, %v1418
  %1434 = vrot.lane.b32.xlu0 %v1431, 122
  %v1435 = vpop.permute.xlu0 %1434
  %1436 = vrot.lane.b32.xlu0 %v1416, 122
  %v1437 = vpop.permute.xlu0 %1436
  %1438 = vrot.lane.b32.xlu0 %v1432, 122
  %v1439 = vpop.permute.xlu0 %1438
  %1440 = vrot.lane.b32.xlu0 %v1417, 122
  %v1441 = vpop.permute.xlu0 %1440
  %1442 = vrot.lane.b32.xlu0 %v1433, 122
  %v1443 = vpop.permute.xlu0 %1442
  %1444 = vrot.lane.b32.xlu0 %v1418, 122
  %v1445 = vpop.permute.xlu0 %1444
  %v1446 = vsel %vm206, %v1435, %v1437
  %v1447 = vsel %vm206, %v1437, %v1439
  %v1448 = vsel %vm206, %v1439, %v1441
  %v1449 = vsel %vm206, %v1441, %v1443
  %v1450 = vsel %vm206, %v1443, %v1445
  %v1457 = vsel %vm59, %v1413, %v1435
  %v1458 = vsel %vm59, %v1422, %v1446
  %v1459 = vsel %vm59, %v1414, %v1447
  %v1460 = vsel %vm59, %v1423, %v1448
  %v1461 = vsel %vm59, %v1415, %v1449
  %v1462 = vsel %vm59, %v1424, %v1450
  %1469 = vrot.lane.b32.xlu0 %v1457, 4
  %v1470 = vpop.permute.xlu0 %1469
  %1471 = vrot.lane.b32.xlu0 %v1458, 4
  %v1472 = vpop.permute.xlu0 %1471
  %1473 = vrot.lane.b32.xlu0 %v1459, 4
  %v1474 = vpop.permute.xlu0 %1473
  %1475 = vrot.lane.b32.xlu0 %v1460, 4
  %v1476 = vpop.permute.xlu0 %1475
  %1477 = vrot.lane.b32.xlu0 %v1461, 4
  %v1478 = vpop.permute.xlu0 %1477
  %1479 = vrot.lane.b32.xlu0 %v1462, 4
  %v1480 = vpop.permute.xlu0 %1479
  %v1481 = vsel %vm489, %v1470, %v1472
  %v1482 = vsel %vm489, %v1472, %v1474
  %v1483 = vsel %vm489, %v1474, %v1476
  %v1484 = vsel %vm489, %v1476, %v1478
  %v1485 = vsel %vm489, %v1478, %v1480
  %1491 = vst [vmem:[#allocation2 + $0x1b8] sm:$0xff] %v1481
  %1492 = vst [vmem:[#allocation2 + $0x1c0] sm:$0xff] %v1482
  %1493 = vst [vmem:[#allocation2 + $0x1c8] sm:$0xff] %v1483
  %1494 = vst [vmem:[#allocation2 + $0x1d0] sm:$0xff] %v1484
  %1495 = vst [vmem:[#allocation2 + $0x1d8] sm:$0xff] %v1485
  %v1496 = vld [vmem:[%s1015 + $0xc] sm:$0xff]
  %v1497 = vld [vmem:[%s1015 + $0x14] sm:$0xff]
  %v1498 = vld [vmem:[%s1015 + $0x1c] sm:$0xff]
  %v1502 = vcombine.high %v1496, %v1496
  %v1503 = vcombine.high %v1497, %v1497
  %v1504 = vcombine.high %v1498, %v1498
  %v1508 = vcombine.low %v1496, %v1496
  %v1509 = vcombine.low %v1497, %v1497
  %v1510 = vcombine.low %v1498, %v1498
  %1511 = vrot.lane.b32.xlu0 %v1508, 116
  %v1512 = vpop.permute.xlu0 %1511
  %1513 = vrot.lane.b32.xlu0 %v1496, 116
  %v1514 = vpop.permute.xlu0 %1513
  %1515 = vrot.lane.b32.xlu0 %v1509, 116
  %v1516 = vpop.permute.xlu0 %1515
  %1517 = vrot.lane.b32.xlu0 %v1497, 116
  %v1518 = vpop.permute.xlu0 %1517
  %1519 = vrot.lane.b32.xlu0 %v1510, 116
  %v1520 = vpop.permute.xlu0 %1519
  %1521 = vrot.lane.b32.xlu0 %v1498, 116
  %v1522 = vpop.permute.xlu0 %1521
  %v1523 = vsel %vm532, %v1512, %v1514
  %v1524 = vsel %vm532, %v1514, %v1516
  %v1525 = vsel %vm532, %v1516, %v1518
  %v1526 = vsel %vm532, %v1518, %v1520
  %v1527 = vsel %vm532, %v1520, %v1522
  %v1534 = vsel %vm59, %v1496, %v1523
  %v1535 = vsel %vm59, %v1502, %v1524
  %v1536 = vsel %vm59, %v1497, %v1525
  %v1537 = vsel %vm59, %v1503, %v1526
  %v1538 = vsel %vm59, %v1498, %v1527
  %v1539 = vsel %vm59, %v1504, %v1522
  %1546 = vrot.lane.b32.xlu0 %v1534, 26
  %v1547 = vpop.permute.xlu0 %1546
  %1548 = vrot.lane.b32.xlu0 %v1535, 26
  %v1549 = vpop.permute.xlu0 %1548
  %1550 = vrot.lane.b32.xlu0 %v1536, 26
  %v1551 = vpop.permute.xlu0 %1550
  %1552 = vrot.lane.b32.xlu0 %v1537, 26
  %v1553 = vpop.permute.xlu0 %1552
  %1554 = vrot.lane.b32.xlu0 %v1538, 26
  %v1555 = vpop.permute.xlu0 %1554
  %1556 = vrot.lane.b32.xlu0 %v1539, 26
  %v1557 = vpop.permute.xlu0 %1556
  %v1558 = vsel %vm568, %v1547, %v1549
  %v1559 = vsel %vm568, %v1549, %v1551
  %v1560 = vsel %vm568, %v1551, %v1553
  %v1561 = vsel %vm568, %v1553, %v1555
  %v1562 = vsel %vm568, %v1555, %v1557
  %1568 = vst [vmem:[#allocation2 + $0x208] sm:$0xff] %v1558
  %1569 = vst [vmem:[#allocation2 + $0x210] sm:$0xff] %v1559
  %1570 = vst [vmem:[#allocation2 + $0x218] sm:$0xff] %v1560
  %1571 = vst [vmem:[#allocation2 + $0x220] sm:$0xff] %v1561
  %1572 = vst [vmem:[#allocation2 + $0x228] sm:$0xff] %v1562
  %v1573 = vld [vmem:[%s1015 + $0x14] sm:$0xff]
  %v1574 = vld [vmem:[%s1015 + $0x1c] sm:$0xff]
  %v1575 = vld [vmem:[%s1015 + $0x24] sm:$0xff]
  %v1579 = vcombine.high %v1573, %v1573
  %v1580 = vcombine.high %v1574, %v1574
  %v1581 = vcombine.high %v1575, %v1575
  %v1585 = vcombine.low %v1573, %v1573
  %v1586 = vcombine.low %v1574, %v1574
  %v1587 = vcombine.low %v1575, %v1575
  %1588 = vrot.lane.b32.xlu0 %v1585, 122
  %v1589 = vpop.permute.xlu0 %1588
  %1590 = vrot.lane.b32.xlu0 %v1573, 122
  %v1591 = vpop.permute.xlu0 %1590
  %1592 = vrot.lane.b32.xlu0 %v1586, 122
  %v1593 = vpop.permute.xlu0 %1592
  %1594 = vrot.lane.b32.xlu0 %v1574, 122
  %v1595 = vpop.permute.xlu0 %1594
  %1596 = vrot.lane.b32.xlu0 %v1587, 122
  %v1597 = vpop.permute.xlu0 %1596
  %1598 = vrot.lane.b32.xlu0 %v1575, 122
  %v1599 = vpop.permute.xlu0 %1598
  %v1600 = vsel %vm206, %v1589, %v1591
  %v1601 = vsel %vm206, %v1591, %v1593
  %v1602 = vsel %vm206, %v1593, %v1595
  %v1603 = vsel %vm206, %v1595, %v1597
  %v1604 = vsel %vm206, %v1597, %v1599
  %v1611 = vsel %vm59, %v1573, %v1600
  %v1612 = vsel %vm59, %v1579, %v1601
  %v1613 = vsel %vm59, %v1574, %v1602
  %v1614 = vsel %vm59, %v1580, %v1603
  %v1615 = vsel %vm59, %v1575, %v1604
  %v1616 = vsel %vm59, %v1581, %v1599
  %1623 = vrot.lane.b32.xlu0 %v1611, 42
  %v1624 = vpop.permute.xlu0 %1623
  %1625 = vrot.lane.b32.xlu0 %v1612, 42
  %v1626 = vpop.permute.xlu0 %1625
  %1627 = vrot.lane.b32.xlu0 %v1613, 42
  %v1628 = vpop.permute.xlu0 %1627
  %1629 = vrot.lane.b32.xlu0 %v1614, 42
  %v1630 = vpop.permute.xlu0 %1629
  %1631 = vrot.lane.b32.xlu0 %v1615, 42
  %v1632 = vpop.permute.xlu0 %1631
  %1633 = vrot.lane.b32.xlu0 %v1616, 42
  %v1634 = vpop.permute.xlu0 %1633
  %v1635 = vsel %vm646, %v1624, %v1626
  %v1636 = vsel %vm646, %v1626, %v1628
  %v1637 = vsel %vm646, %v1628, %v1630
  %v1638 = vsel %vm646, %v1630, %v1632
  %v1639 = vsel %vm646, %v1632, %v1634
  %1645 = vst [vmem:[#allocation2 + $0x258] sm:$0xff] %v1635
  %1646 = vst [vmem:[#allocation2 + $0x260] sm:$0xff] %v1636
  %1647 = vst [vmem:[#allocation2 + $0x268] sm:$0xff] %v1637
  %1648 = vst [vmem:[#allocation2 + $0x270] sm:$0xff] %v1638
  %1649 = vst [vmem:[#allocation2 + $0x278] sm:$0xff] %v1639
  %v1650 = vld [vmem:[%s1015 + $0x14] sm:$0xff]
  %v1651 = vld [vmem:[%s1015 + $0x1c] sm:$0xff]
  %v1652 = vld [vmem:[%s1015 + $0x24] sm:$0xff]
  %v1653 = vld [vmem:[%s1015] sm:$0xff]
  %v1654 = vld [vmem:[%s1015 + $0x8] sm:$0xff]
  %v1655 = vld [vmem:[%s1015 + $0x10] sm:$0xf]
  %v1659 = vcombine.high %v1650, %v1650
  %v1660 = vcombine.high %v1651, %v1651
  %v1661 = vcombine.high %v1652, %v1652
  %v1668 = vcombine.low %v1653, %v1653
  %v1669 = vcombine.low %v1654, %v1654
  %v1670 = vcombine.low %v1655, %v1655
  %1671 = vrot.lane.b32.xlu0 %v1668, 98
  %v1672 = vpop.permute.xlu0 %1671
  %1673 = vrot.lane.b32.xlu0 %v1653, 98
  %v1674 = vpop.permute.xlu0 %1673
  %1675 = vrot.lane.b32.xlu0 %v1669, 98
  %v1676 = vpop.permute.xlu0 %1675
  %1677 = vrot.lane.b32.xlu0 %v1654, 98
  %v1678 = vpop.permute.xlu0 %1677
  %1679 = vrot.lane.b32.xlu0 %v1670, 98
  %v1680 = vpop.permute.xlu0 %1679
  %v1681 = vsel %vm693, %v1672, %v1674
  %v1682 = vsel %vm693, %v1674, %v1676
  %v1683 = vsel %vm693, %v1676, %v1678
  %v1684 = vsel %vm693, %v1678, %v1680
  %v1691 = vsel %vm59, %v1650, %v1672
  %v1692 = vsel %vm59, %v1659, %v1681
  %v1693 = vsel %vm59, %v1651, %v1682
  %v1694 = vsel %vm59, %v1660, %v1683
  %v1695 = vsel %vm59, %v1652, %v1684
  %v1696 = vsel %vm59, %v1661, %v1680
  %1703 = vrot.lane.b32.xlu0 %v1691, 30
  %v1704 = vpop.permute.xlu0 %1703
  %1705 = vrot.lane.b32.xlu0 %v1692, 30
  %v1706 = vpop.permute.xlu0 %1705
  %1707 = vrot.lane.b32.xlu0 %v1693, 30
  %v1708 = vpop.permute.xlu0 %1707
  %1709 = vrot.lane.b32.xlu0 %v1694, 30
  %v1710 = vpop.permute.xlu0 %1709
  %1711 = vrot.lane.b32.xlu0 %v1695, 30
  %v1712 = vpop.permute.xlu0 %1711
  %1713 = vrot.lane.b32.xlu0 %v1696, 30
  %v1714 = vpop.permute.xlu0 %1713
  %v1715 = vsel %vm728, %v1704, %v1706
  %v1716 = vsel %vm728, %v1706, %v1708
  %v1717 = vsel %vm728, %v1708, %v1710
  %v1718 = vsel %vm728, %v1710, %v1712
  %v1719 = vsel %vm728, %v1712, %v1714
  %1725 = vst [vmem:[#allocation2 + $0x2a8] sm:$0xff] %v1715
  %1726 = vst [vmem:[#allocation2 + $0x2b0] sm:$0xff] %v1716
  %1727 = vst [vmem:[#allocation2 + $0x2b8] sm:$0xff] %v1717
  %1728 = vst [vmem:[#allocation2 + $0x2c0] sm:$0xff] %v1718
  %1729 = vst [vmem:[#allocation2 + $0x2c8] sm:$0xff] %v1719
  %v1730 = vld [vmem:[%s1015] sm:$0xff]
  %v1731 = vld [vmem:[%s1015 + $0x8] sm:$0xff]
  %v1732 = vld [vmem:[%s1015 + $0x10] sm:$0xff]
  %v1736 = vcombine.high %v1730, %v1730
  %v1737 = vcombine.high %v1731, %v1731
  %v1738 = vcombine.high %v1732, %v1732
  %v1742 = vcombine.low %v1730, %v1730
  %v1743 = vcombine.low %v1731, %v1731
  %v1744 = vcombine.low %v1732, %v1732
  %1745 = vrot.lane.b32.xlu0 %v1742, 116
  %v1746 = vpop.permute.xlu0 %1745
  %1747 = vrot.lane.b32.xlu0 %v1730, 116
  %v1748 = vpop.permute.xlu0 %1747
  %1749 = vrot.lane.b32.xlu0 %v1743, 116
  %v1750 = vpop.permute.xlu0 %1749
  %1751 = vrot.lane.b32.xlu0 %v1731, 116
  %v1752 = vpop.permute.xlu0 %1751
  %1753 = vrot.lane.b32.xlu0 %v1744, 116
  %v1754 = vpop.permute.xlu0 %1753
  %1755 = vrot.lane.b32.xlu0 %v1732, 116
  %v1756 = vpop.permute.xlu0 %1755
  %v1757 = vsel %vm532, %v1746, %v1748
  %v1758 = vsel %vm532, %v1748, %v1750
  %v1759 = vsel %vm532, %v1750, %v1752
  %v1760 = vsel %vm532, %v1752, %v1754
  %v1761 = vsel %vm532, %v1754, %v1756
  %v1768 = vsel %vm59, %v1730, %v1757
  %v1769 = vsel %vm59, %v1736, %v1758
  %v1770 = vsel %vm59, %v1731, %v1759
  %v1771 = vsel %vm59, %v1737, %v1760
  %v1772 = vsel %vm59, %v1732, %v1761
  %v1773 = vsel %vm59, %v1738, %v1756
  %1780 = vrot.lane.b32.xlu0 %v1768, 116
  %v1781 = vpop.permute.xlu0 %1780
  %1782 = vrot.lane.b32.xlu0 %v1769, 116
  %v1783 = vpop.permute.xlu0 %1782
  %1784 = vrot.lane.b32.xlu0 %v1770, 116
  %v1785 = vpop.permute.xlu0 %1784
  %1786 = vrot.lane.b32.xlu0 %v1771, 116
  %v1787 = vpop.permute.xlu0 %1786
  %1788 = vrot.lane.b32.xlu0 %v1772, 116
  %v1789 = vpop.permute.xlu0 %1788
  %1790 = vrot.lane.b32.xlu0 %v1773, 116
  %v1791 = vpop.permute.xlu0 %1790
  %v1792 = vsel %vm532, %v1781, %v1783
  %v1793 = vsel %vm532, %v1783, %v1785
  %v1794 = vsel %vm532, %v1785, %v1787
  %v1795 = vsel %vm532, %v1787, %v1789
  %v1796 = vsel %vm532, %v1789, %v1791
  %1802 = vst [vmem:[#allocation2 + $0x2f8] sm:$0xff] %v1792
  %1803 = vst [vmem:[#allocation2 + $0x300] sm:$0xff] %v1793
  %1804 = vst [vmem:[#allocation2 + $0x308] sm:$0xff] %v1794
  %1805 = vst [vmem:[#allocation2 + $0x310] sm:$0xff] %v1795
  %1806 = vst [vmem:[#allocation2 + $0x318] sm:$0xff] %v1796
  %v1807 = vld [vmem:[%s1015 + $0xc] sm:$0xff]
  %v1808 = vld [vmem:[%s1015 + $0x14] sm:$0xff]
  %v1809 = vld [vmem:[%s1015 + $0x1c] sm:$0xff]
  %v1813 = vcombine.high %v1807, %v1807
  %v1814 = vcombine.high %v1808, %v1808
  %v1815 = vcombine.high %v1809, %v1809
  %v1819 = vcombine.low %v1807, %v1807
  %v1820 = vcombine.low %v1808, %v1808
  %v1821 = vcombine.low %v1809, %v1809
  %1822 = vrot.lane.b32.xlu0 %v1819, 104
  %v1823 = vpop.permute.xlu0 %1822
  %1824 = vrot.lane.b32.xlu0 %v1807, 104
  %v1825 = vpop.permute.xlu0 %1824
  %1826 = vrot.lane.b32.xlu0 %v1820, 104
  %v1827 = vpop.permute.xlu0 %1826
  %1828 = vrot.lane.b32.xlu0 %v1808, 104
  %v1829 = vpop.permute.xlu0 %1828
  %1830 = vrot.lane.b32.xlu0 %v1821, 104
  %v1831 = vpop.permute.xlu0 %1830
  %1832 = vrot.lane.b32.xlu0 %v1809, 104
  %v1833 = vpop.permute.xlu0 %1832
  %v1834 = vsel %vm848, %v1823, %v1825
  %v1835 = vsel %vm848, %v1825, %v1827
  %v1836 = vsel %vm848, %v1827, %v1829
  %v1837 = vsel %vm848, %v1829, %v1831
  %v1838 = vsel %vm848, %v1831, %v1833
  %v1845 = vsel %vm59, %v1807, %v1834
  %v1846 = vsel %vm59, %v1813, %v1835
  %v1847 = vsel %vm59, %v1808, %v1836
  %v1848 = vsel %vm59, %v1814, %v1837
  %v1849 = vsel %vm59, %v1809, %v1838
  %v1850 = vsel %vm59, %v1815, %v1833
  %1857 = vrot.lane.b32.xlu0 %v1845, 32
  %v1858 = vpop.permute.xlu0 %1857
  %1859 = vrot.lane.b32.xlu0 %v1846, 32
  %v1860 = vpop.permute.xlu0 %1859
  %1861 = vrot.lane.b32.xlu0 %v1847, 32
  %v1862 = vpop.permute.xlu0 %1861
  %1863 = vrot.lane.b32.xlu0 %v1848, 32
  %v1864 = vpop.permute.xlu0 %1863
  %1865 = vrot.lane.b32.xlu0 %v1849, 32
  %v1866 = vpop.permute.xlu0 %1865
  %1867 = vrot.lane.b32.xlu0 %v1850, 32
  %v1868 = vpop.permute.xlu0 %1867
  %v1869 = vsel %vm884, %v1858, %v1860
  %v1870 = vsel %vm884, %v1860, %v1862
  %v1871 = vsel %vm884, %v1862, %v1864
  %v1872 = vsel %vm884, %v1864, %v1866
  %v1873 = vsel %vm884, %v1866, %v1868
  %1879 = vst [vmem:[#allocation2 + $0x348] sm:$0xff] %v1869
  %1880 = vst [vmem:[#allocation2 + $0x350] sm:$0xff] %v1870
  %1881 = vst [vmem:[#allocation2 + $0x358] sm:$0xff] %v1871
  %1882 = vst [vmem:[#allocation2 + $0x360] sm:$0xff] %v1872
  %1883 = vst [vmem:[#allocation2 + $0x368] sm:$0xff] %v1873
  %v1884 = vld [vmem:[%s1015 + $0x1c] sm:$0xff]
  %v1885 = vld [vmem:[%s1015 + $0x24] sm:$0xff]
  %v1886 = vld [vmem:[%s1015 + $0x2c] sm:$0xff]
  %v1890 = vcombine.high %v1884, %v1884
  %v1891 = vcombine.high %v1885, %v1885
  %v1892 = vcombine.high %v1886, %v1886
  %v1896 = vcombine.low %v1884, %v1884
  %v1897 = vcombine.low %v1885, %v1885
  %v1898 = vcombine.low %v1886, %v1886
  %1899 = vrot.lane.b32.xlu0 %v1896, 116
  %v1900 = vpop.permute.xlu0 %1899
  %1901 = vrot.lane.b32.xlu0 %v1884, 116
  %v1902 = vpop.permute.xlu0 %1901
  %1903 = vrot.lane.b32.xlu0 %v1897, 116
  %v1904 = vpop.permute.xlu0 %1903
  %1905 = vrot.lane.b32.xlu0 %v1885, 116
  %v1906 = vpop.permute.xlu0 %1905
  %1907 = vrot.lane.b32.xlu0 %v1898, 116
  %v1908 = vpop.permute.xlu0 %1907
  %1909 = vrot.lane.b32.xlu0 %v1886, 116
  %v1910 = vpop.permute.xlu0 %1909
  %v1911 = vsel %vm532, %v1900, %v1902
  %v1912 = vsel %vm532, %v1902, %v1904
  %v1913 = vsel %vm532, %v1904, %v1906
  %v1914 = vsel %vm532, %v1906, %v1908
  %v1915 = vsel %vm532, %v1908, %v1910
  %v1922 = vsel %vm59, %v1884, %v1911
  %v1923 = vsel %vm59, %v1890, %v1912
  %v1924 = vsel %vm59, %v1885, %v1913
  %v1925 = vsel %vm59, %v1891, %v1914
  %v1926 = vsel %vm59, %v1886, %v1915
  %v1927 = vsel %vm59, %v1892, %v1910
  %1934 = vrot.lane.b32.xlu0 %v1922, 64
  %v1935 = vpop.permute.xlu0 %1934
  %1936 = vrot.lane.b32.xlu0 %v1923, 64
  %v1937 = vpop.permute.xlu0 %1936
  %1938 = vrot.lane.b32.xlu0 %v1924, 64
  %v1939 = vpop.permute.xlu0 %1938
  %1940 = vrot.lane.b32.xlu0 %v1925, 64
  %v1941 = vpop.permute.xlu0 %1940
  %1942 = vrot.lane.b32.xlu0 %v1926, 64
  %v1943 = vpop.permute.xlu0 %1942
  %1944 = vrot.lane.b32.xlu0 %v1927, 64
  %v1945 = vpop.permute.xlu0 %1944
  %v1946 = vsel %vm962, %v1935, %v1937
  %v1947 = vsel %vm962, %v1937, %v1939
  %v1948 = vsel %vm962, %v1939, %v1941
  %v1949 = vsel %vm962, %v1941, %v1943
  %v1950 = vsel %vm962, %v1943, %v1945
  %1956 = vst [vmem:[#allocation2 + $0x398] sm:$0xff] %v1946
  %1957 = vst [vmem:[#allocation2 + $0x3a0] sm:$0xff] %v1947
  %1958 = vst [vmem:[#allocation2 + $0x3a8] sm:$0xff] %v1948
  %1959 = vst [vmem:[#allocation2 + $0x3b0] sm:$0xff] %v1949
  %1960 = vst [vmem:[#allocation2 + $0x3b8] sm:$0xff] %v1950
  %v1961 = vld [vmem:[%s1015 + $0x1c] sm:$0xff]
  %v1962 = vld [vmem:[%s1015 + $0x24] sm:$0xff]
  %v1963 = vld [vmem:[%s1015 + $0x2c] sm:$0xff]
  %v1967 = vcombine.high %v1961, %v1961
  %v1968 = vcombine.high %v1962, %v1962
  %v1969 = vcombine.high %v1963, %v1963
  %1970 = vrot.lane.b32.xlu0 %v1961, 40
  %v1971 = vpop.permute.xlu0 %1970
  %1972 = vrot.lane.b32.xlu0 %v1967, 40
  %v1973 = vpop.permute.xlu0 %1972
  %1974 = vrot.lane.b32.xlu0 %v1962, 40
  %v1975 = vpop.permute.xlu0 %1974
  %1976 = vrot.lane.b32.xlu0 %v1968, 40
  %v1977 = vpop.permute.xlu0 %1976
  %1978 = vrot.lane.b32.xlu0 %v1963, 40
  %v1979 = vpop.permute.xlu0 %1978
  %1980 = vrot.lane.b32.xlu0 %v1969, 40
  %v1981 = vpop.permute.xlu0 %1980
  %v1982 = vsel %vm999, %v1971, %v1973
  %v1983 = vsel %vm999, %v1973, %v1975
  %v1984 = vsel %vm999, %v1975, %v1977
  %v1985 = vsel %vm999, %v1977, %v1979
  %v1986 = vsel %vm999, %v1979, %v1981
  %1992 = vst [vmem:[#allocation2 + $0x3e8] sm:$0xf] %v1982
  %1993 = vst [vmem:[#allocation2 + $0x3f0] sm:$0xf] %v1983
  %1994 = vst [vmem:[#allocation2 + $0x3f8] sm:$0xf] %v1984
  %1995 = vst [vmem:[#allocation2 + $0x400] sm:$0xf] %v1985
  %1996 = vst [vmem:[#allocation2 + $0x408] sm:$0xf] %v1986
  %v1997 = vld [vmem:[%s1] sm:$0xff]
  %v1998 = vld [vmem:[%s1 + $0x8] sm:$0xff]
  %v1999 = vld [vmem:[%s1 + $0x10] sm:$0xff]
  %v2000 = vld [vmem:[%s1 + $0x18] sm:$0xff]
  %v2001 = vld [vmem:[#allocation2] sm:$0xff]
  %v2002 = vld [vmem:[#allocation2 + $0x8] sm:$0xff]
  %v2003 = vld [vmem:[#allocation2 + $0x10] sm:$0xff]
  %v2004 = vld [vmem:[#allocation2 + $0x18] sm:$0xff]
  %v2005 = vld [vmem:[#allocation2 + $0x20] sm:$0xff]
  %v2006 = vld [vmem:[#allocation2 + $0x28] sm:$0xff]
  %v2007 = vld [vmem:[#allocation2 + $0x30] sm:$0xff]
  %v2008 = vld [vmem:[#allocation2 + $0x38] sm:$0xff]
  %v2009 = vld [vmem:[#allocation2 + $0x40] sm:$0xff]
  %v2010 = vld [vmem:[#allocation2 + $0x48] sm:$0xff]
  %v2011 = vld [vmem:[#allocation2 + $0x50] sm:$0xff]
  %v2012 = vld [vmem:[#allocation2 + $0x58] sm:$0xff]
  %v2013 = vld [vmem:[#allocation2 + $0x60] sm:$0xff]
  %v2014 = vld [vmem:[#allocation2 + $0x68] sm:$0xff]
  %v2015 = vld [vmem:[#allocation2 + $0x70] sm:$0xff]
  %v2016 = vld [vmem:[#allocation2 + $0x78] sm:$0xff]
  %v2017 = vld [vmem:[#allocation2 + $0x80] sm:$0xff]
  %v2018 = vld [vmem:[#allocation2 + $0x88] sm:$0xff]
  %v2019 = vld [vmem:[#allocation2 + $0x90] sm:$0xff]
  %v2020 = vld [vmem:[#allocation2 + $0x98] sm:$0xff]
  %v2021 = vld [vmem:[#allocation2 + $0xa0] sm:$0xff]
  %v2022 = vld [vmem:[#allocation2 + $0xa8] sm:$0xff]
  %v2023 = vld [vmem:[#allocation2 + $0xb0] sm:$0xff]
  %v2024 = vld [vmem:[#allocation2 + $0xb8] sm:$0xff]
  %v2025 = vld [vmem:[#allocation2 + $0xc0] sm:$0xff]
  %v2026 = vld [vmem:[#allocation2 + $0xc8] sm:$0xff]
  %v2027 = vld [vmem:[#allocation2 + $0xd0] sm:$0xff]
  %v2028 = vld [vmem:[#allocation2 + $0xd8] sm:$0xff]
  %v2029 = vld [vmem:[#allocation2 + $0xe0] sm:$0xff]
  %v2030 = vld [vmem:[#allocation2 + $0xe8] sm:$0xff]
  %v2031 = vld [vmem:[#allocation2 + $0xf0] sm:$0xff]
  %v2032 = vld [vmem:[#allocation2 + $0xf8] sm:$0xff]
  %v2033 = vld [vmem:[#allocation2 + $0x100] sm:$0xff]
  %v2034 = vld [vmem:[#allocation2 + $0x108] sm:$0xff]
  %v2035 = vld [vmem:[#allocation2 + $0x110] sm:$0xff]
  %v2036 = vld [vmem:[#allocation2 + $0x118] sm:$0xff]
  %v2037 = vld [vmem:[#allocation2 + $0x120] sm:$0xff]
  %v2038 = vld [vmem:[#allocation2 + $0x128] sm:$0xff]
  %v2039 = vld [vmem:[#allocation2 + $0x130] sm:$0xff]
  %v2040 = vld [vmem:[#allocation2 + $0x138] sm:$0xff]
  %v2041 = vld [vmem:[#allocation2 + $0x140] sm:$0xff]
  %v2042 = vld [vmem:[#allocation2 + $0x148] sm:$0xff]
  %v2043 = vld [vmem:[#allocation2 + $0x150] sm:$0xff]
  %v2044 = vld [vmem:[#allocation2 + $0x158] sm:$0xff]
  %v2045 = vld [vmem:[#allocation2 + $0x160] sm:$0xff]
  %v2046 = vld [vmem:[#allocation2 + $0x168] sm:$0xff]
  %v2047 = vld [vmem:[#allocation2 + $0x170] sm:$0xff]
  %v2048 = vld [vmem:[#allocation2 + $0x178] sm:$0xff]
  %v2049 = vld [vmem:[#allocation2 + $0x180] sm:$0xff]
  %v2050 = vld [vmem:[#allocation2 + $0x188] sm:$0xff]
  %v2051 = vld [vmem:[#allocation2 + $0x190] sm:$0xff]
  %v2052 = vld [vmem:[#allocation2 + $0x198] sm:$0xff]
  %v2053 = vld [vmem:[#allocation2 + $0x1a0] sm:$0xff]
  %v2054 = vld [vmem:[#allocation2 + $0x1a8] sm:$0xff]
  %v2055 = vld [vmem:[#allocation2 + $0x1b0] sm:$0xff]
  %v2056 = vld [vmem:[#allocation2 + $0x1b8] sm:$0xff]
  %v2057 = vld [vmem:[#allocation2 + $0x1c0] sm:$0xff]
  %v2058 = vld [vmem:[#allocation2 + $0x1c8] sm:$0xff]
  %v2059 = vld [vmem:[#allocation2 + $0x1d0] sm:$0xff]
  %v2060 = vld [vmem:[#allocation2 + $0x1d8] sm:$0xff]
  %v2061 = vld [vmem:[#allocation2 + $0x1e0] sm:$0xff]
  %v2062 = vld [vmem:[#allocation2 + $0x1e8] sm:$0xff]
  %v2063 = vld [vmem:[#allocation2 + $0x1f0] sm:$0xff]
  %v2064 = vld [vmem:[#allocation2 + $0x1f8] sm:$0xff]
  %v2065 = vld [vmem:[#allocation2 + $0x200] sm:$0xff]
  %v2066 = vld [vmem:[#allocation2 + $0x208] sm:$0xff]
  %v2067 = vld [vmem:[#allocation2 + $0x210] sm:$0xff]
  %v2068 = vld [vmem:[#allocation2 + $0x218] sm:$0xff]
  %v2069 = vld [vmem:[#allocation2 + $0x220] sm:$0xff]
  %v2070 = vld [vmem:[#allocation2 + $0x228] sm:$0xff]
  %v2071 = vld [vmem:[#allocation2 + $0x230] sm:$0xff]
  %v2072 = vld [vmem:[#allocation2 + $0x238] sm:$0xff]
  %v2073 = vld [vmem:[#allocation2 + $0x240] sm:$0xff]
  %v2074 = vld [vmem:[#allocation2 + $0x248] sm:$0xff]
  %v2075 = vld [vmem:[#allocation2 + $0x250] sm:$0xff]
  %v2076 = vld [vmem:[#allocation2 + $0x258] sm:$0xff]
  %v2077 = vld [vmem:[#allocation2 + $0x260] sm:$0xff]
  %v2078 = vld [vmem:[#allocation2 + $0x268] sm:$0xff]
  %v2079 = vld [vmem:[#allocation2 + $0x270] sm:$0xff]
  %v2080 = vld [vmem:[#allocation2 + $0x278] sm:$0xff]
  %v2081 = vld [vmem:[#allocation2 + $0x280] sm:$0xff]
  %v2082 = vld [vmem:[#allocation2 + $0x288] sm:$0xff]
  %v2083 = vld [vmem:[#allocation2 + $0x290] sm:$0xff]
  %v2084 = vld [vmem:[#allocation2 + $0x298] sm:$0xff]
  %v2085 = vld [vmem:[#allocation2 + $0x2a0] sm:$0xff]
  %v2086 = vld [vmem:[#allocation2 + $0x2a8] sm:$0xff]
  %v2087 = vld [vmem:[#allocation2 + $0x2b0] sm:$0xff]
  %v2088 = vld [vmem:[#allocation2 + $0x2b8] sm:$0xff]
  %v2089 = vld [vmem:[#allocation2 + $0x2c0] sm:$0xff]
  %v2090 = vld [vmem:[#allocation2 + $0x2c8] sm:$0xff]
  %v2091 = vld [vmem:[#allocation2 + $0x2d0] sm:$0xff]
  %v2092 = vld [vmem:[#allocation2 + $0x2d8] sm:$0xff]
  %v2093 = vld [vmem:[#allocation2 + $0x2e0] sm:$0xff]
  %v2094 = vld [vmem:[#allocation2 + $0x2e8] sm:$0xff]
  %v2095 = vld [vmem:[#allocation2 + $0x2f0] sm:$0xff]
  %v2096 = vld [vmem:[#allocation2 + $0x2f8] sm:$0xff]
  %v2097 = vld [vmem:[#allocation2 + $0x300] sm:$0xff]
  %v2098 = vld [vmem:[#allocation2 + $0x308] sm:$0xff]
  %v2099 = vld [vmem:[#allocation2 + $0x310] sm:$0xff]
  %v2100 = vld [vmem:[#allocation2 + $0x318] sm:$0xff]
  %v2101 = vld [vmem:[#allocation2 + $0x320] sm:$0xff]
  %v2102 = vld [vmem:[#allocation2 + $0x328] sm:$0xff]
  %v2103 = vld [vmem:[#allocation2 + $0x330] sm:$0xff]
  %v2104 = vld [vmem:[#allocation2 + $0x338] sm:$0xff]
  %v2105 = vld [vmem:[#allocation2 + $0x340] sm:$0xff]
  %v2106 = vld [vmem:[#allocation2 + $0x348] sm:$0xff]
  %v2107 = vld [vmem:[#allocation2 + $0x350] sm:$0xff]
  %v2108 = vld [vmem:[#allocation2 + $0x358] sm:$0xff]
  %v2109 = vld [vmem:[#allocation2 + $0x360] sm:$0xff]
  %v2110 = vld [vmem:[#allocation2 + $0x368] sm:$0xff]
  %v2111 = vld [vmem:[#allocation2 + $0x370] sm:$0xff]
  %v2112 = vld [vmem:[#allocation2 + $0x378] sm:$0xff]
  %v2113 = vld [vmem:[#allocation2 + $0x380] sm:$0xff]
  %v2114 = vld [vmem:[#allocation2 + $0x388] sm:$0xff]
  %v2115 = vld [vmem:[#allocation2 + $0x390] sm:$0xff]
  %v2116 = vld [vmem:[#allocation2 + $0x398] sm:$0xff]
  %v2117 = vld [vmem:[#allocation2 + $0x3a0] sm:$0xff]
  %v2118 = vld [vmem:[#allocation2 + $0x3a8] sm:$0xff]
  %v2119 = vld [vmem:[#allocation2 + $0x3b0] sm:$0xff]
  %v2120 = vld [vmem:[#allocation2 + $0x3b8] sm:$0xff]
  %v2121 = vld [vmem:[#allocation2 + $0x3c0] sm:$0xf]
  %v2122 = vld [vmem:[#allocation2 + $0x3c8] sm:$0xf]
  %v2123 = vld [vmem:[#allocation2 + $0x3d0] sm:$0xf]
  %v2124 = vld [vmem:[#allocation2 + $0x3d8] sm:$0xf]
  %v2125 = vld [vmem:[#allocation2 + $0x3e0] sm:$0xf]
  %v2126 = vld [vmem:[#allocation2 + $0x3e8] sm:$0xf]
  %v2127 = vld [vmem:[#allocation2 + $0x3f0] sm:$0xf]
  %v2128 = vld [vmem:[#allocation2 + $0x3f8] sm:$0xf]
  %v2129 = vld [vmem:[#allocation2 + $0x400] sm:$0xf]
  %v2130 = vld [vmem:[#allocation2 + $0x408] sm:$0xf]
  %v2131 = vld [vmem:[%s2] sm:$0xff]
  %v2132 = vld [vmem:[%s2 + $0x8] sm:$0xff]
  %v2133 = vld [vmem:[%s2 + $0x10] sm:$0xff]
  %v2134 = vld [vmem:[%s2 + $0x18] sm:$0xff]
  %2136 = vset.pattern.permute.xlu0 0
  %2137 = vperm.xlu0 %2136, %v2131
  %v2138 = vpop.permute.xlu0 %2137
  %2141 = vset.pattern.permute.xlu0 0
  %2142 = vperm.xlu0 %2141, %v2132
  %v2143 = vpop.permute.xlu0 %2142
  %2146 = vset.pattern.permute.xlu0 0
  %2147 = vperm.xlu0 %2146, %v2133
  %v2148 = vpop.permute.xlu0 %2147
  %2151 = vset.pattern.permute.xlu0 0
  %2152 = vperm.xlu0 %2151, %v2134
  %v2153 = vpop.permute.xlu0 %2152
  %vm2155 = vcmask 818176
  %v2157 = vsel %vm2155, %v1997, 0
  %v2160 = vsel %vm2155, %v1998, 0
  %v2163 = vsel %vm2155, %v1999, 0
  %v2166 = vsel %vm2155, %v2000, 0
  %v2169 = vsel %vm59, %v2121, 0
  %v2172 = vsel %vm59, %v2122, 0
  %v2175 = vsel %vm59, %v2123, 0
  %v2178 = vsel %vm59, %v2124, 0
  %v2181 = vsel %vm59, %v2125, 0
  %v2184 = vsel %vm59, %v2126, 0
  %v2187 = vsel %vm59, %v2127, 0
  %v2190 = vsel %vm59, %v2128, 0
  %v2193 = vsel %vm59, %v2129, 0
  %v2196 = vsel %vm59, %v2130, 0
  %2198 = vmatprep.subr.mxu0 %v2002
  %2199 = vmatpush1.msra.mxu0 %v2001
  %2200 = vmatprep.subr.mxu0 %v2012
  %2201 = vmatpush1.msra.mxu0 %v2011
  %2202 = vmatprep.subr.mxu0 %v2022
  %2203 = vmatpush1.msra.mxu0 %v2021
  %2204 = vmatprep.subr.mxu0 %v2032
  %2205 = vmatpush1.msra.mxu0 %v2031
  %2206 = vmatprep.subr.mxu0 %v2042
  %2207 = vmatpush1.msra.mxu0 %v2041
  %2208 = vmatprep.subr.mxu0 %v2052
  %2209 = vmatpush1.msra.mxu0 %v2051
  %2210 = vmatprep.subr.mxu0 %v2062
  %2211 = vmatpush1.msra.mxu0 %v2061
  %2212 = vmatprep.subr.mxu0 %v2072
  %2213 = vmatpush1.msra.mxu0 %v2071
  %2214 = vmatprep.subr.mxu0 %v2082
  %2215 = vmatpush1.msra.mxu0 %v2081
  %2216 = vmatprep.subr.mxu0 %v2092
  %2217 = vmatpush1.msra.mxu0 %v2091
  %2218 = vmatprep.subr.mxu0 %v2102
  %2219 = vmatpush1.msra.mxu0 %v2101
  %2220 = vmatprep.subr.mxu0 %v2112
  %2221 = vmatpush1.msra.mxu0 %v2111
  %2222 = vmatprep.subr.mxu0 %v2172
  %2223 = vmatpush1.msra.mxu0 %v2169
  %2224 = vmatprep.subr.mxu0 0.0
  %2225 = vmatpush1.msra.mxu0 0.0
  %2226 = vmatprep.subr.mxu0 0.0
  %2227 = vmatpush1.msra.mxu0 0.0
  %2228 = vmatprep.subr.mxu0 0.0
  %2229 = vmatpush1.msra.mxu0 0.0
  %2230 = vmatprep.subr.mxu0 0.0
  %2231 = vmatpush1.msra.mxu0 0.0
  %2232 = vmatprep.subr.mxu0 0.0
  %2233 = vmatpush1.msra.mxu0 0.0
  %2234 = vmatprep.subr.mxu0 0.0
  %2235 = vmatpush1.msra.mxu0 0.0
  %2236 = vmatprep.subr.mxu0 0.0
  %2237 = vmatpush1.msra.mxu0 0.0
  %2238 = vmatprep.subr.mxu0 0.0
  %2239 = vmatpush1.msra.mxu0 0.0
  %2240 = vmatprep.subr.mxu0 0.0
  %2241 = vmatpush1.msra.mxu0 0.0
  %2242 = vmatprep.subr.mxu0 0.0
  %2243 = vmatpush1.msra.mxu0 0.0
  %2244 = vmatprep.subr.mxu0 0.0
  %2245 = vmatpush1.msra.mxu0 0.0
  %2246 = vmatprep.subr.mxu0 0.0
  %2247 = vmatpush1.msra.mxu0 0.0
  %2248 = vmatprep.subr.mxu0 0.0
  %2249 = vmatpush1.msra.mxu0 0.0
  %2250 = vmatprep.subr.mxu0 0.0
  %2251 = vmatpush1.msra.mxu0 0.0
  %2252 = vmatprep.subr.mxu0 0.0
  %2253 = vmatpush1.msra.mxu0 0.0
  %2254 = vmatprep.subr.mxu0 0.0
  %2255 = vmatpush1.msra.mxu0 0.0
  %2256 = vmatprep.subr.mxu0 0.0
  %2257 = vmatpush1.msra.mxu0 0.0
  %2258 = vmatprep.subr.mxu0 0.0
  %2259 = vmatpush1.msra.mxu0 0.0
  %2260 = vmatprep.subr.mxu0 0.0
  %2261 = vmatpush1.msra.mxu0 0.0
  %2262 = vmatprep.mubr.f32.mxu0 0.0
  %2263 = vmatmul.mubr.f32.gmra.mrb[0].mxu0 %v2157
  %v2264 = vpop.f32.mrb[0].mxu0
  %v2265 = vadd.f32 %v2138, %v2264
  %v2266 = vpop.f32.mrb[0].mxu0
  %v2267 = vadd.f32 %v2138, %v2266
  %2268 = vmatprep.mubr.f32.mxu0 0.0
  %2269 = vmatmul.mubr.f32.gmra.mrb[0].mxu0 %v2160
  %v2270 = vpop.f32.mrb[0].mxu0
  %v2271 = vadd.f32 %v2143, %v2270
  %v2272 = vpop.f32.mrb[0].mxu0
  %v2273 = vadd.f32 %v2143, %v2272
  %2274 = vmatprep.mubr.f32.mxu0 0.0
  %2275 = vmatmul.mubr.f32.gmra.mrb[0].mxu0 %v2163
  %v2276 = vpop.f32.mrb[0].mxu0
  %v2277 = vadd.f32 %v2148, %v2276
  %v2278 = vpop.f32.mrb[0].mxu0
  %v2279 = vadd.f32 %v2148, %v2278
  %2280 = vmatprep.mubr.f32.mxu0 0.0
  %2281 = vmatmul.mubr.f32.gmra.mrb[0].mxu0 %v2166
  %v2282 = vpop.f32.mrb[0].mxu0
  %v2283 = vadd.f32 %v2153, %v2282
  %v2284 = vpop.f32.mrb[0].mxu0
  %v2285 = vadd.f32 %v2153, %v2284
  %2286 = vdwg.mxu0
  %2287 = vmatprep.subr.mxu0 %v2004
  %2288 = vmatpush1.msra.mxu0 %v2003
  %2289 = vmatprep.subr.mxu0 %v2014
  %2290 = vmatpush1.msra.mxu0 %v2013
  %2291 = vmatprep.subr.mxu0 %v2024
  %2292 = vmatpush1.msra.mxu0 %v2023
  %2293 = vmatprep.subr.mxu0 %v2034
  %2294 = vmatpush1.msra.mxu0 %v2033
  %2295 = vmatprep.subr.mxu0 %v2044
  %2296 = vmatpush1.msra.mxu0 %v2043
  %2297 = vmatprep.subr.mxu0 %v2054
  %2298 = vmatpush1.msra.mxu0 %v2053
  %2299 = vmatprep.subr.mxu0 %v2064
  %2300 = vmatpush1.msra.mxu0 %v2063
  %2301 = vmatprep.subr.mxu0 %v2074
  %2302 = vmatpush1.msra.mxu0 %v2073
  %2303 = vmatprep.subr.mxu0 %v2084
  %2304 = vmatpush1.msra.mxu0 %v2083
  %2305 = vmatprep.subr.mxu0 %v2094
  %2306 = vmatpush1.msra.mxu0 %v2093
  %2307 = vmatprep.subr.mxu0 %v2104
  %2308 = vmatpush1.msra.mxu0 %v2103
  %2309 = vmatprep.subr.mxu0 %v2114
  %2310 = vmatpush1.msra.mxu0 %v2113
  %2311 = vmatprep.subr.mxu0 %v2178
  %2312 = vmatpush1.msra.mxu0 %v2175
  %2313 = vmatprep.subr.mxu0 0.0
  %2314 = vmatpush1.msra.mxu0 0.0
  %2315 = vmatprep.subr.mxu0 0.0
  %2316 = vmatpush1.msra.mxu0 0.0
  %2317 = vmatprep.subr.mxu0 0.0
  %2318 = vmatpush1.msra.mxu0 0.0
  %2319 = vmatprep.subr.mxu0 0.0
  %2320 = vmatpush1.msra.mxu0 0.0
  %2321 = vmatprep.subr.mxu0 0.0
  %2322 = vmatpush1.msra.mxu0 0.0
  %2323 = vmatprep.subr.mxu0 0.0
  %2324 = vmatpush1.msra.mxu0 0.0
  %2325 = vmatprep.subr.mxu0 0.0
  %2326 = vmatpush1.msra.mxu0 0.0
  %2327 = vmatprep.subr.mxu0 0.0
  %2328 = vmatpush1.msra.mxu0 0.0
  %2329 = vmatprep.subr.mxu0 0.0
  %2330 = vmatpush1.msra.mxu0 0.0
  %2331 = vmatprep.subr.mxu0 0.0
  %2332 = vmatpush1.msra.mxu0 0.0
  %2333 = vmatprep.subr.mxu0 0.0
  %2334 = vmatpush1.msra.mxu0 0.0
  %2335 = vmatprep.subr.mxu0 0.0
  %2336 = vmatpush1.msra.mxu0 0.0
  %2337 = vmatprep.subr.mxu0 0.0
  %2338 = vmatpush1.msra.mxu0 0.0
  %2339 = vmatprep.subr.mxu0 0.0
  %2340 = vmatpush1.msra.mxu0 0.0
  %2341 = vmatprep.subr.mxu0 0.0
  %2342 = vmatpush1.msra.mxu0 0.0
  %2343 = vmatprep.subr.mxu0 0.0
  %2344 = vmatpush1.msra.mxu0 0.0
  %2345 = vmatprep.subr.mxu0 0.0
  %2346 = vmatpush1.msra.mxu0 0.0
  %2347 = vmatprep.subr.mxu0 0.0
  %2348 = vmatpush1.msra.mxu0 0.0
  %2349 = vmatprep.subr.mxu0 0.0
  %2350 = vmatpush1.msra.mxu0 0.0
  %2351 = vmatprep.mubr.f32.mxu0 0.0
  %2352 = vmatmul.mubr.f32.gmra.mrb[0].mxu0 %v2157
  %v2353 = vpop.f32.mrb[0].mxu0
  %v2354 = vadd.f32 %v2138, %v2353
  %v2355 = vpop.f32.mrb[0].mxu0
  %v2356 = vadd.f32 %v2138, %v2355
  %2357 = vmatprep.mubr.f32.mxu0 0.0
  %2358 = vmatmul.mubr.f32.gmra.mrb[0].mxu0 %v2160
  %v2359 = vpop.f32.mrb[0].mxu0
  %v2360 = vadd.f32 %v2143, %v2359
  %v2361 = vpop.f32.mrb[0].mxu0
  %v2362 = vadd.f32 %v2143, %v2361
  %2363 = vmatprep.mubr.f32.mxu0 0.0
  %2364 = vmatmul.mubr.f32.gmra.mrb[0].mxu0 %v2163
  %v2365 = vpop.f32.mrb[0].mxu0
  %v2366 = vadd.f32 %v2148, %v2365
  %v2367 = vpop.f32.mrb[0].mxu0
  %v2368 = vadd.f32 %v2148, %v2367
  %2369 = vmatprep.mubr.f32.mxu0 0.0
  %2370 = vmatmul.mubr.f32.gmra.mrb[0].mxu0 %v2166
  %v2371 = vpop.f32.mrb[0].mxu0
  %v2372 = vadd.f32 %v2153, %v2371
  %v2373 = vpop.f32.mrb[0].mxu0
  %v2374 = vadd.f32 %v2153, %v2373
  %2375 = vdwg.mxu0
  %2376 = vmatprep.subr.mxu0 %v2006
  %2377 = vmatpush1.msra.mxu0 %v2005
  %2378 = vmatprep.subr.mxu0 %v2016
  %2379 = vmatpush1.msra.mxu0 %v2015
  %2380 = vmatprep.subr.mxu0 %v2026
  %2381 = vmatpush1.msra.mxu0 %v2025
  %2382 = vmatprep.subr.mxu0 %v2036
  %2383 = vmatpush1.msra.mxu0 %v2035
  %2384 = vmatprep.subr.mxu0 %v2046
  %2385 = vmatpush1.msra.mxu0 %v2045
  %2386 = vmatprep.subr.mxu0 %v2056
  %2387 = vmatpush1.msra.mxu0 %v2055
  %2388 = vmatprep.subr.mxu0 %v2066
  %2389 = vmatpush1.msra.mxu0 %v2065
  %2390 = vmatprep.subr.mxu0 %v2076
  %2391 = vmatpush1.msra.mxu0 %v2075
  %2392 = vmatprep.subr.mxu0 %v2086
  %2393 = vmatpush1.msra.mxu0 %v2085
  %2394 = vmatprep.subr.mxu0 %v2096
  %2395 = vmatpush1.msra.mxu0 %v2095
  %2396 = vmatprep.subr.mxu0 %v2106
  %2397 = vmatpush1.msra.mxu0 %v2105
  %2398 = vmatprep.subr.mxu0 %v2116
  %2399 = vmatpush1.msra.mxu0 %v2115
  %2400 = vmatprep.subr.mxu0 %v2184
  %2401 = vmatpush1.msra.mxu0 %v2181
  %2402 = vmatprep.subr.mxu0 0.0
  %2403 = vmatpush1.msra.mxu0 0.0
  %2404 = vmatprep.subr.mxu0 0.0
  %2405 = vmatpush1.msra.mxu0 0.0
  %2406 = vmatprep.subr.mxu0 0.0
  %2407 = vmatpush1.msra.mxu0 0.0
  %2408 = vmatprep.subr.mxu0 0.0
  %2409 = vmatpush1.msra.mxu0 0.0
  %2410 = vmatprep.subr.mxu0 0.0
  %2411 = vmatpush1.msra.mxu0 0.0
  %2412 = vmatprep.subr.mxu0 0.0
  %2413 = vmatpush1.msra.mxu0 0.0
  %2414 = vmatprep.subr.mxu0 0.0
  %2415 = vmatpush1.msra.mxu0 0.0
  %2416 = vmatprep.subr.mxu0 0.0
  %2417 = vmatpush1.msra.mxu0 0.0
  %2418 = vmatprep.subr.mxu0 0.0
  %2419 = vmatpush1.msra.mxu0 0.0
  %2420 = vmatprep.subr.mxu0 0.0
  %2421 = vmatpush1.msra.mxu0 0.0
  %2422 = vmatprep.subr.mxu0 0.0
  %2423 = vmatpush1.msra.mxu0 0.0
  %2424 = vmatprep.subr.mxu0 0.0
  %2425 = vmatpush1.msra.mxu0 0.0
  %2426 = vmatprep.subr.mxu0 0.0
  %2427 = vmatpush1.msra.mxu0 0.0
  %2428 = vmatprep.subr.mxu0 0.0
  %2429 = vmatpush1.msra.mxu0 0.0
  %2430 = vmatprep.subr.mxu0 0.0
  %2431 = vmatpush1.msra.mxu0 0.0
  %2432 = vmatprep.subr.mxu0 0.0
  %2433 = vmatpush1.msra.mxu0 0.0
  %2434 = vmatprep.subr.mxu0 0.0
  %2435 = vmatpush1.msra.mxu0 0.0
  %2436 = vmatprep.subr.mxu0 0.0
  %2437 = vmatpush1.msra.mxu0 0.0
  %2438 = vmatprep.subr.mxu0 0.0
  %2439 = vmatpush1.msra.mxu0 0.0
  %2440 = vmatprep.mubr.f32.mxu0 0.0
  %2441 = vmatmul.mubr.f32.gmra.mrb[0].mxu0 %v2157
  %v2442 = vpop.f32.mrb[0].mxu0
  %v2443 = vadd.f32 %v2138, %v2442
  %v2444 = vpop.f32.mrb[0].mxu0
  %v2445 = vadd.f32 %v2138, %v2444
  %2446 = vmatprep.mubr.f32.mxu0 0.0
  %2447 = vmatmul.mubr.f32.gmra.mrb[0].mxu0 %v2160
  %v2448 = vpop.f32.mrb[0].mxu0
  %v2449 = vadd.f32 %v2143, %v2448
  %v2450 = vpop.f32.mrb[0].mxu0
  %v2451 = vadd.f32 %v2143, %v2450
  %2452 = vmatprep.mubr.f32.mxu0 0.0
  %2453 = vmatmul.mubr.f32.gmra.mrb[0].mxu0 %v2163
  %v2454 = vpop.f32.mrb[0].mxu0
  %v2455 = vadd.f32 %v2148, %v2454
  %v2456 = vpop.f32.mrb[0].mxu0
  %v2457 = vadd.f32 %v2148, %v2456
  %2458 = vmatprep.mubr.f32.mxu0 0.0
  %2459 = vmatmul.mubr.f32.gmra.mrb[0].mxu0 %v2166
  %v2460 = vpop.f32.mrb[0].mxu0
  %v2461 = vadd.f32 %v2153, %v2460
  %v2462 = vpop.f32.mrb[0].mxu0
  %v2463 = vadd.f32 %v2153, %v2462
  %2464 = vdwg.mxu0
  %2465 = vmatprep.subr.mxu0 %v2008
  %2466 = vmatpush1.msra.mxu0 %v2007
  %2467 = vmatprep.subr.mxu0 %v2018
  %2468 = vmatpush1.msra.mxu0 %v2017
  %2469 = vmatprep.subr.mxu0 %v2028
  %2470 = vmatpush1.msra.mxu0 %v2027
  %2471 = vmatprep.subr.mxu0 %v2038
  %2472 = vmatpush1.msra.mxu0 %v2037
  %2473 = vmatprep.subr.mxu0 %v2048
  %2474 = vmatpush1.msra.mxu0 %v2047
  %2475 = vmatprep.subr.mxu0 %v2058
  %2476 = vmatpush1.msra.mxu0 %v2057
  %2477 = vmatprep.subr.mxu0 %v2068
  %2478 = vmatpush1.msra.mxu0 %v2067
  %2479 = vmatprep.subr.mxu0 %v2078
  %2480 = vmatpush1.msra.mxu0 %v2077
  %2481 = vmatprep.subr.mxu0 %v2088
  %2482 = vmatpush1.msra.mxu0 %v2087
  %2483 = vmatprep.subr.mxu0 %v2098
  %2484 = vmatpush1.msra.mxu0 %v2097
  %2485 = vmatprep.subr.mxu0 %v2108
  %2486 = vmatpush1.msra.mxu0 %v2107
  %2487 = vmatprep.subr.mxu0 %v2118
  %2488 = vmatpush1.msra.mxu0 %v2117
  %2489 = vmatprep.subr.mxu0 %v2190
  %2490 = vmatpush1.msra.mxu0 %v2187
  %2491 = vmatprep.subr.mxu0 0.0
  %2492 = vmatpush1.msra.mxu0 0.0
  %2493 = vmatprep.subr.mxu0 0.0
  %2494 = vmatpush1.msra.mxu0 0.0
  %2495 = vmatprep.subr.mxu0 0.0
  %2496 = vmatpush1.msra.mxu0 0.0
  %2497 = vmatprep.subr.mxu0 0.0
  %2498 = vmatpush1.msra.mxu0 0.0
  %2499 = vmatprep.subr.mxu0 0.0
  %2500 = vmatpush1.msra.mxu0 0.0
  %2501 = vmatprep.subr.mxu0 0.0
  %2502 = vmatpush1.msra.mxu0 0.0
  %2503 = vmatprep.subr.mxu0 0.0
  %2504 = vmatpush1.msra.mxu0 0.0
  %2505 = vmatprep.subr.mxu0 0.0
  %2506 = vmatpush1.msra.mxu0 0.0
  %2507 = vmatprep.subr.mxu0 0.0
  %2508 = vmatpush1.msra.mxu0 0.0
  %2509 = vmatprep.subr.mxu0 0.0
  %2510 = vmatpush1.msra.mxu0 0.0
  %2511 = vmatprep.subr.mxu0 0.0
  %2512 = vmatpush1.msra.mxu0 0.0
  %2513 = vmatprep.subr.mxu0 0.0
  %2514 = vmatpush1.msra.mxu0 0.0
  %2515 = vmatprep.subr.mxu0 0.0
  %2516 = vmatpush1.msra.mxu0 0.0
  %2517 = vmatprep.subr.mxu0 0.0
  %2518 = vmatpush1.msra.mxu0 0.0
  %2519 = vmatprep.subr.mxu0 0.0
  %2520 = vmatpush1.msra.mxu0 0.0
  %2521 = vmatprep.subr.mxu0 0.0
  %2522 = vmatpush1.msra.mxu0 0.0
  %2523 = vmatprep.subr.mxu0 0.0
  %2524 = vmatpush1.msra.mxu0 0.0
  %2525 = vmatprep.subr.mxu0 0.0
  %2526 = vmatpush1.msra.mxu0 0.0
  %2527 = vmatprep.subr.mxu0 0.0
  %2528 = vmatpush1.msra.mxu0 0.0
  %2529 = vmatprep.mubr.f32.mxu0 0.0
  %2530 = vmatmul.mubr.f32.gmra.mrb[0].mxu0 %v2157
  %v2531 = vpop.f32.mrb[0].mxu0
  %v2532 = vadd.f32 %v2138, %v2531
  %v2533 = vpop.f32.mrb[0].mxu0
  %v2534 = vadd.f32 %v2138, %v2533
  %2535 = vmatprep.mubr.f32.mxu0 0.0
  %2536 = vmatmul.mubr.f32.gmra.mrb[0].mxu0 %v2160
  %v2537 = vpop.f32.mrb[0].mxu0
  %v2538 = vadd.f32 %v2143, %v2537
  %v2539 = vpop.f32.mrb[0].mxu0
  %v2540 = vadd.f32 %v2143, %v2539
  %2541 = vmatprep.mubr.f32.mxu0 0.0
  %2542 = vmatmul.mubr.f32.gmra.mrb[0].mxu0 %v2163
  %v2543 = vpop.f32.mrb[0].mxu0
  %v2544 = vadd.f32 %v2148, %v2543
  %v2545 = vpop.f32.mrb[0].mxu0
  %v2546 = vadd.f32 %v2148, %v2545
  %2547 = vmatprep.mubr.f32.mxu0 0.0
  %2548 = vmatmul.mubr.f32.gmra.mrb[0].mxu0 %v2166
  %v2549 = vpop.f32.mrb[0].mxu0
  %v2550 = vadd.f32 %v2153, %v2549
  %v2551 = vpop.f32.mrb[0].mxu0
  %v2552 = vadd.f32 %v2153, %v2551
  %2553 = vdwg.mxu0
  %2554 = vmatprep.subr.mxu0 %v2010
  %2555 = vmatpush1.msra.mxu0 %v2009
  %2556 = vmatprep.subr.mxu0 %v2020
  %2557 = vmatpush1.msra.mxu0 %v2019
  %2558 = vmatprep.subr.mxu0 %v2030
  %2559 = vmatpush1.msra.mxu0 %v2029
  %2560 = vmatprep.subr.mxu0 %v2040
  %2561 = vmatpush1.msra.mxu0 %v2039
  %2562 = vmatprep.subr.mxu0 %v2050
  %2563 = vmatpush1.msra.mxu0 %v2049
  %2564 = vmatprep.subr.mxu0 %v2060
  %2565 = vmatpush1.msra.mxu0 %v2059
  %2566 = vmatprep.subr.mxu0 %v2070
  %2567 = vmatpush1.msra.mxu0 %v2069
  %2568 = vmatprep.subr.mxu0 %v2080
  %2569 = vmatpush1.msra.mxu0 %v2079
  %2570 = vmatprep.subr.mxu0 %v2090
  %2571 = vmatpush1.msra.mxu0 %v2089
  %2572 = vmatprep.subr.mxu0 %v2100
  %2573 = vmatpush1.msra.mxu0 %v2099
  %2574 = vmatprep.subr.mxu0 %v2110
  %2575 = vmatpush1.msra.mxu0 %v2109
  %2576 = vmatprep.subr.mxu0 %v2120
  %2577 = vmatpush1.msra.mxu0 %v2119
  %2578 = vmatprep.subr.mxu0 %v2196
  %2579 = vmatpush1.msra.mxu0 %v2193
  %2580 = vmatprep.subr.mxu0 0.0
  %2581 = vmatpush1.msra.mxu0 0.0
  %2582 = vmatprep.subr.mxu0 0.0
  %2583 = vmatpush1.msra.mxu0 0.0
  %2584 = vmatprep.subr.mxu0 0.0
  %2585 = vmatpush1.msra.mxu0 0.0
  %2586 = vmatprep.subr.mxu0 0.0
  %2587 = vmatpush1.msra.mxu0 0.0
  %2588 = vmatprep.subr.mxu0 0.0
  %2589 = vmatpush1.msra.mxu0 0.0
  %2590 = vmatprep.subr.mxu0 0.0
  %2591 = vmatpush1.msra.mxu0 0.0
  %2592 = vmatprep.subr.mxu0 0.0
  %2593 = vmatpush1.msra.mxu0 0.0
  %2594 = vmatprep.subr.mxu0 0.0
  %2595 = vmatpush1.msra.mxu0 0.0
  %2596 = vmatprep.subr.mxu0 0.0
  %2597 = vmatpush1.msra.mxu0 0.0
  %2598 = vmatprep.subr.mxu0 0.0
  %2599 = vmatpush1.msra.mxu0 0.0
  %2600 = vmatprep.subr.mxu0 0.0
  %2601 = vmatpush1.msra.mxu0 0.0
  %2602 = vmatprep.subr.mxu0 0.0
  %2603 = vmatpush1.msra.mxu0 0.0
  %2604 = vmatprep.subr.mxu0 0.0
  %2605 = vmatpush1.msra.mxu0 0.0
  %2606 = vmatprep.subr.mxu0 0.0
  %2607 = vmatpush1.msra.mxu0 0.0
  %2608 = vmatprep.subr.mxu0 0.0
  %2609 = vmatpush1.msra.mxu0 0.0
  %2610 = vmatprep.subr.mxu0 0.0
  %2611 = vmatpush1.msra.mxu0 0.0
  %2612 = vmatprep.subr.mxu0 0.0
  %2613 = vmatpush1.msra.mxu0 0.0
  %2614 = vmatprep.subr.mxu0 0.0
  %2615 = vmatpush1.msra.mxu0 0.0
  %2616 = vmatprep.subr.mxu0 0.0
  %2617 = vmatpush1.msra.mxu0 0.0
  %2618 = vmatprep.mubr.f32.mxu0 0.0
  %2619 = vmatmul.mubr.f32.gmra.mrb[0].mxu0 %v2157
  %v2620 = vpop.f32.mrb[0].mxu0
  %v2621 = vadd.f32 %v2138, %v2620
  %v2622 = vpop.f32.mrb[0].mxu0
  %v2623 = vadd.f32 %v2138, %v2622
  %2624 = vmatprep.mubr.f32.mxu0 0.0
  %2625 = vmatmul.mubr.f32.gmra.mrb[0].mxu0 %v2160
  %v2626 = vpop.f32.mrb[0].mxu0
  %v2627 = vadd.f32 %v2143, %v2626
  %v2628 = vpop.f32.mrb[0].mxu0
  %v2629 = vadd.f32 %v2143, %v2628
  %2630 = vmatprep.mubr.f32.mxu0 0.0
  %2631 = vmatmul.mubr.f32.gmra.mrb[0].mxu0 %v2163
  %v2632 = vpop.f32.mrb[0].mxu0
  %v2633 = vadd.f32 %v2148, %v2632
  %v2634 = vpop.f32.mrb[0].mxu0
  %v2635 = vadd.f32 %v2148, %v2634
  %2636 = vmatprep.mubr.f32.mxu0 0.0
  %2637 = vmatmul.mubr.f32.gmra.mrb[0].mxu0 %v2166
  %v2638 = vpop.f32.mrb[0].mxu0
  %v2639 = vadd.f32 %v2153, %v2638
  %v2640 = vpop.f32.mrb[0].mxu0
  %v2641 = vadd.f32 %v2153, %v2640
  %2642 = vdwg.mxu0
  %v2643 = vmax.f32 %v2265, 0.0
  %v2644 = vmax.f32 %v2267, 0.0
  %v2645 = vmax.f32 %v2354, 0.0
  %v2646 = vmax.f32 %v2356, 0.0
  %v2647 = vmax.f32 %v2443, 0.0
  %v2648 = vmax.f32 %v2445, 0.0
  %v2649 = vmax.f32 %v2532, 0.0
  %v2650 = vmax.f32 %v2534, 0.0
  %v2651 = vmax.f32 %v2621, 0.0
  %v2652 = vmax.f32 %v2623, 0.0
  %v2653 = vmax.f32 %v2271, 0.0
  %v2654 = vmax.f32 %v2273, 0.0
  %v2655 = vmax.f32 %v2360, 0.0
  %v2656 = vmax.f32 %v2362, 0.0
  %v2657 = vmax.f32 %v2449, 0.0
  %v2658 = vmax.f32 %v2451, 0.0
  %v2659 = vmax.f32 %v2538, 0.0
  %v2660 = vmax.f32 %v2540, 0.0
  %v2661 = vmax.f32 %v2627, 0.0
  %v2662 = vmax.f32 %v2629, 0.0
  %v2663 = vmax.f32 %v2277, 0.0
  %v2664 = vmax.f32 %v2279, 0.0
  %v2665 = vmax.f32 %v2366, 0.0
  %v2666 = vmax.f32 %v2368, 0.0
  %v2667 = vmax.f32 %v2455, 0.0
  %v2668 = vmax.f32 %v2457, 0.0
  %v2669 = vmax.f32 %v2544, 0.0
  %v2670 = vmax.f32 %v2546, 0.0
  %v2671 = vmax.f32 %v2633, 0.0
  %v2672 = vmax.f32 %v2635, 0.0
  %v2673 = vmax.f32 %v2283, 0.0
  %v2674 = vmax.f32 %v2285, 0.0
  %v2675 = vmax.f32 %v2372, 0.0
  %v2676 = vmax.f32 %v2374, 0.0
  %v2677 = vmax.f32 %v2461, 0.0
  %v2678 = vmax.f32 %v2463, 0.0
  %v2679 = vmax.f32 %v2550, 0.0
  %v2680 = vmax.f32 %v2552, 0.0
  %v2681 = vmax.f32 %v2639, 0.0
  %v2682 = vmax.f32 %v2641, 0.0
  %2683 = vst [vmem:[%s3] sm:$0xff] %v2643
  %2684 = vst [vmem:[%s3 + $0x8] sm:$0xff] %v2644
  %2685 = vst [vmem:[%s3 + $0x10] sm:$0xff] %v2645
  %2686 = vst [vmem:[%s3 + $0x18] sm:$0xff] %v2646
  %2687 = vst [vmem:[%s3 + $0x20] sm:$0xff] %v2647
  %2688 = vst [vmem:[%s3 + $0x28] sm:$0xff] %v2653
  %2689 = vst [vmem:[%s3 + $0x30] sm:$0xff] %v2654
  %2690 = vst [vmem:[%s3 + $0x38] sm:$0xff] %v2655
  %2691 = vst [vmem:[%s3 + $0x40] sm:$0xff] %v2656
  %2692 = vst [vmem:[%s3 + $0x48] sm:$0xff] %v2657
  %2693 = vst [vmem:[%s3 + $0x50] sm:$0xff] %v2663
  %2694 = vst [vmem:[%s3 + $0x58] sm:$0xff] %v2664
  %2695 = vst [vmem:[%s3 + $0x60] sm:$0xff] %v2665
  %2696 = vst [vmem:[%s3 + $0x68] sm:$0xff] %v2666
  %2697 = vst [vmem:[%s3 + $0x70] sm:$0xff] %v2667
  %2698 = vst [vmem:[%s3 + $0x78] sm:$0xff] %v2673
  %2699 = vst [vmem:[%s3 + $0x80] sm:$0xff] %v2674
  %2700 = vst [vmem:[%s3 + $0x88] sm:$0xff] %v2675
  %2701 = vst [vmem:[%s3 + $0x90] sm:$0xff] %v2676
  %2702 = vst [vmem:[%s3 + $0x98] sm:$0xff] %v2677
  %s2703 = scalar_lea.vmem %s3, 160
  %2704 = vst [vmem:[%s2703] sm:$0xff] %v2648
  %2705 = vst [vmem:[%s2703 + $0x8] sm:$0xff] %v2649
  %2706 = vst [vmem:[%s2703 + $0x10] sm:$0xff] %v2650
  %2707 = vst [vmem:[%s2703 + $0x18] sm:$0xff] %v2651
  %2708 = vst [vmem:[%s2703 + $0x20] sm:$0xff] %v2652
  %2709 = vst [vmem:[%s2703 + $0x28] sm:$0xff] %v2658
  %2710 = vst [vmem:[%s2703 + $0x30] sm:$0xff] %v2659
  %2711 = vst [vmem:[%s2703 + $0x38] sm:$0xff] %v2660
  %2712 = vst [vmem:[%s2703 + $0x40] sm:$0xff] %v2661
  %2713 = vst [vmem:[%s2703 + $0x48] sm:$0xff] %v2662
  %2714 = vst [vmem:[%s2703 + $0x50] sm:$0xff] %v2668
  %2715 = vst [vmem:[%s2703 + $0x58] sm:$0xff] %v2669
  %2716 = vst [vmem:[%s2703 + $0x60] sm:$0xff] %v2670
  %2717 = vst [vmem:[%s2703 + $0x68] sm:$0xff] %v2671
  %2718 = vst [vmem:[%s2703 + $0x70] sm:$0xff] %v2672
  %2719 = vst [vmem:[%s2703 + $0x78] sm:$0xff] %v2678
  %2720 = vst [vmem:[%s2703 + $0x80] sm:$0xff] %v2679
  %2721 = vst [vmem:[%s2703 + $0x88] sm:$0xff] %v2680
  %2722 = vst [vmem:[%s2703 + $0x90] sm:$0xff] %v2681
  %2723 = vst [vmem:[%s2703 + $0x98] sm:$0xff] %v2682
  // Predicated region
  $region14: #{dscu_forward.1} parent=0 // pred_check
    _
  $region15: #{dscu_forward.1} parent=0 // pred_check_branch
    %2725 = sbr.rel (0) target = $region17
  $region16: #{dscu_forward.1} parent=0 // pred_region
    _
  $region17: #{dscu_forward.1} parent=0 // pred_fallthru
    _
  // Predicated region
  $region18: #{dscu_forward.1} parent=0 // pred_check
    _
  $region19: #{dscu_forward.1} parent=0 // pred_check_branch
    %2727 = sbr.rel (0) target = $region21
  $region20: #{dscu_forward.1} parent=0 // pred_region
    _
  $region21: #{dscu_forward.1} parent=0 // pred_fallthru
    _

</llo_original>
